<compile_context>
chip_gen: v6e
topology: v6e:2x2x1
jax: 0.10.0
libtpu: 0.0.40
codegen_flags: <defaults>
</compile_context>

<pallas_src>
import math
import jax
import jax.numpy as jnp
from jax.experimental import pallas as pl

# ----------------------------- model config ---------------------------------
B = 2          # batch
S = 8          # sequence length
D = 32         # d_model
H = 4          # nhead
FF = 64        # dim_feedforward (kept small; module default is 256)
EPS = 1e-5     # nn.LayerNorm default eps


# --------------------------- shared math helpers ------------------------------
def _layernorm(x, g, b):
    mu = jnp.mean(x, axis=-1, keepdims=True)
    var = jnp.mean((x - mu) ** 2, axis=-1, keepdims=True)
    return (x - mu) * jax.lax.rsqrt(var + EPS) * g + b


# ------------------------------- kernel --------------------------------------
def make_han_kernel(nhead, batch, seqlen, d_model):
    dh = d_model // nhead
    scale = 1.0 / math.sqrt(dh)
    rows = batch * seqlen

    def kernel(q_ref, wqkv_ref, bqkv_ref, wo_ref, bo_ref,
               w1_ref, b1_ref, w2_ref, b2_ref,
               g1_ref, be1_ref, g2_ref, be2_ref,
               out_ref):
        # Whole problem lives in VMEM: flatten batch*seq for all projections.
        x = q_ref[...].reshape(rows, d_model)                      # (B*S, D)
        wo = wo_ref[...]                                           # (D, D)

        # ---- fused QKV projection: one (B*S, D) @ (D, 3D) matmul ----
        qkv = jnp.dot(x, wqkv_ref[...],
                      preferred_element_type=jnp.float32) + bqkv_ref[...]
        qkv = qkv.reshape(batch, seqlen, 3 * d_model)              # (B, S, 3D)

        # ---- multi-head self-attention (batched over B per head) ----
        # Heads are a static 4-iteration loop (Mosaic can't lower the 4-D
        # transpose needed to batch H into the einsum).  The head concat is
        # replaced by accumulating each head through its slice of W_out.
        attn = jnp.zeros((rows, d_model), jnp.float32)
        for h in range(nhead):
            lo = h * dh
            qh = qkv[:, :, lo:lo + dh] * scale                     # (B, S, dh)
            kh = qkv[:, :, d_model + lo:d_model + lo + dh]         # (B, S, dh)
            vh = qkv[:, :, 2 * d_model + lo:2 * d_model + lo + dh] # (B, S, dh)

            logits = jnp.einsum('bqd,bkd->bqk', qh, kh,
                                preferred_element_type=jnp.float32)  # (B,S,S)
            logits = logits - jnp.max(logits, axis=-1, keepdims=True)
            p = jnp.exp(logits)
            p = p * pl.reciprocal(jnp.sum(p, axis=-1, keepdims=True),
                                  approx=True)
            ctx = jnp.einsum('bqk,bkd->bqd', p, vh,
                             preferred_element_type=jnp.float32)     # (B,S,dh)
            attn = attn + jnp.dot(ctx.reshape(rows, dh),
                                  wo[lo:lo + dh, :],
                                  preferred_element_type=jnp.float32)
        src2 = attn + bo_ref[...]

        # ---- residual + LayerNorm1 ----
        x1 = _layernorm(x + src2, g1_ref[...], be1_ref[...])

        # ---- FFN + residual + LayerNorm2 ----
        h1 = jnp.dot(x1, w1_ref[...],
                     preferred_element_type=jnp.float32) + b1_ref[...]
        h1 = jnp.maximum(h1, 0.0)                                  # ReLU
        ff = jnp.dot(h1, w2_ref[...],
                     preferred_element_type=jnp.float32) + b2_ref[...]
        y = _layernorm(x1 + ff, g2_ref[...], be2_ref[...])

        out_ref[...] = y.reshape(batch, seqlen, d_model).astype(out_ref.dtype)

    return kernel


# ------------------------------ wrapper --------------------------------------
def _full_spec(shape):
    nd = len(shape)
    return pl.BlockSpec(shape, lambda *_: (0,) * nd)


def han_layer(src_q, src_v, params, nhead):
    del src_v  # feeds only the dead cm_attn path of the PyTorch module
    b, s, d = src_q.shape

    # Fuse Q/K/V projection weights/biases into a single (D, 3D) projection.
    wqkv = jnp.concatenate([params["wq"], params["wk"], params["wv"]], axis=1)
    bqkv = jnp.concatenate([params["bq"], params["bk"], params["bv"]], axis=1)

    args = (src_q, wqkv, bqkv, params["wo"], params["bo"],
            params["w1"], params["b1"], params["w2"], params["b2"],
            params["g1"], params["be1"], params["g2"], params["be2"])

    # Single-shot (gridless) call: every operand fits trivially in VMEM, so
    # each is mapped as one full-array block.  For large B on v7x, add a
    # "parallel" batch grid axis here to engage the second TensorCore.
    return pl.pallas_call(
        make_han_kernel(nhead, b, s, d),
        out_shape=jax.ShapeDtypeStruct((b, s, d), src_q.dtype),
        in_specs=[_full_spec(a.shape) for a in args],
        out_specs=_full_spec((b, s, d)),
    )(*args)


# --------------------------- pure-JAX reference -------------------------------
def han_layer_ref(src_q, src_v, p, nhead):
    del src_v
    b, s, d = src_q.shape
    dh = d // nhead
    scale = 1.0 / math.sqrt(dh)

    x = src_q.reshape(b * s, d)
    q = x @ p["wq"] + p["bq"]
    k = x @ p["wk"] + p["bk"]
    v = x @ p["wv"] + p["bv"]

    qh = q.reshape(b, s, nhead, dh).transpose(0, 2, 1, 3)   # (B, H, S, dh)
    kh = k.reshape(b, s, nhead, dh).transpose(0, 2, 1, 3)
    vh = v.reshape(b, s, nhead, dh).transpose(0, 2, 1, 3)

    logits = jnp.einsum('bhqd,bhkd->bhqk', qh * scale, kh)
    pattn = jax.nn.softmax(logits, axis=-1)
    ctx = jnp.einsum('bhqk,bhkd->bhqd', pattn, vh)
    ctx = ctx.transpose(0, 2, 1, 3).reshape(b * s, d)

    src2 = ctx @ p["wo"] + p["bo"]
    x1 = _layernorm(x + src2, p["g1"], p["be1"])
    h1 = jnp.maximum(x1 @ p["w1"] + p["b1"], 0.0)
    y = _layernorm(x1 + h1 @ p["w2"] + p["b2"], p["g2"], p["be2"])
    return y.reshape(b, s, d)


# ------------------------------- params --------------------------------------
def init_params(key, d_model, nhead, dim_ff):
    ks = jax.random.split(key, 8)
    sc_d = 1.0 / math.sqrt(d_model)
    sc_f = 1.0 / math.sqrt(dim_ff)
    return {
        # attention in/out projections (stored as (in, out) = W^T)
        "wq": jax.random.normal(ks[0], (d_model, d_model), jnp.float32) * sc_d,
        "wk": jax.random.normal(ks[1], (d_model, d_model), jnp.float32) * sc_d,
        "wv": jax.random.normal(ks[2], (d_model, d_model), jnp.float32) * sc_d,
        "bq": jnp.zeros((1, d_model), jnp.float32),
        "bk": jnp.zeros((1, d_model), jnp.float32),
        "bv": jnp.zeros((1, d_model), jnp.float32),
        "wo": jax.random.normal(ks[3], (d_model, d_model), jnp.float32) * sc_d,
        "bo": jax.random.normal(ks[4], (1, d_model), jnp.float32) * 0.01,
        # feed-forward
        "w1": jax.random.normal(ks[5], (d_model, dim_ff), jnp.float32) * sc_d,
        "b1": jax.random.normal(ks[6], (1, dim_ff), jnp.float32) * 0.01,
        "w2": jax.random.normal(ks[7], (dim_ff, d_model), jnp.float32) * sc_f,
        "b2": jnp.zeros((1, d_model), jnp.float32),
        # LayerNorms
        "g1": jnp.ones((1, d_model), jnp.float32),
        "be1": jnp.zeros((1, d_model), jnp.float32),
        "g2": jnp.ones((1, d_model), jnp.float32),
        "be2": jnp.zeros((1, d_model), jnp.float32),
    }


# -------------------------------- main ----------------------------------------
if __name__ == "__main__":
    key = jax.random.PRNGKey(0)
    k_q, k_v, k_p = jax.random.split(key, 3)
    src_q = jax.random.normal(k_q, (B, S, D), jnp.float32)
    src_v = jax.random.normal(k_v, (B, S, D), jnp.float32)
    params = init_params(k_p, D, H, FF)

    out = jax.block_until_ready(han_layer(src_q, src_v, params, H))
    ref = jax.block_until_ready(han_layer_ref(src_q, src_v, params, H))

    assert out.shape == (B, S, D)
    assert jnp.allclose(out, ref, rtol=2e-2, atol=2e-2), "mismatch vs reference"

    print("KERNEL_OK")
</pallas_src>

<mosaic_0001>
module attributes {stable_mosaic.version = 11 : i64} {
  func.func @kernel(%arg0: memref<2x8x32xf32, #tpu.memory_space<vmem>>, %arg1: memref<32x96xf32, #tpu.memory_space<vmem>>, %arg2: memref<1x96xf32, #tpu.memory_space<vmem>>, %arg3: memref<32x32xf32, #tpu.memory_space<vmem>>, %arg4: memref<1x32xf32, #tpu.memory_space<vmem>>, %arg5: memref<32x64xf32, #tpu.memory_space<vmem>>, %arg6: memref<1x64xf32, #tpu.memory_space<vmem>>, %arg7: memref<64x32xf32, #tpu.memory_space<vmem>>, %arg8: memref<1x32xf32, #tpu.memory_space<vmem>>, %arg9: memref<1x32xf32, #tpu.memory_space<vmem>>, %arg10: memref<1x32xf32, #tpu.memory_space<vmem>>, %arg11: memref<1x32xf32, #tpu.memory_space<vmem>>, %arg12: memref<1x32xf32, #tpu.memory_space<vmem>>, %arg13: memref<2x8x32xf32, #tpu.memory_space<vmem>>) attributes {dimension_semantics = [], scalar_prefetch = 0 : i64, scratch_operands = 0 : i64, tpu.core_type = #tpu.core_type<tc>} {
    %c0 = arith.constant 0 : index
    %c0_0 = arith.constant 0 : index
    %c0_1 = arith.constant 0 : index
    %0 = vector.load %arg0[%c0, %c0_0, %c0_1] : memref<2x8x32xf32, #tpu.memory_space<vmem>>, vector<2x8x32xf32>
    %1 = vector.shape_cast %0 : vector<2x8x32xf32> to vector<16x32xf32>
    %c0_2 = arith.constant 0 : index
    %c0_3 = arith.constant 0 : index
    %2 = vector.load %arg3[%c0_2, %c0_3] : memref<32x32xf32, #tpu.memory_space<vmem>>, vector<32x32xf32>
    %c0_4 = arith.constant 0 : index
    %c0_5 = arith.constant 0 : index
    %3 = vector.load %arg1[%c0_4, %c0_5] : memref<32x96xf32, #tpu.memory_space<vmem>>, vector<32x96xf32>
    %cst = arith.constant dense<0.000000e+00> : vector<16x96xf32>
    %4 = tpu.matmul %1, %3, %cst {dimension_numbers = #tpu.dot_dimension_numbers<[1], [0], [0], [1], [0, 0, 1, 1], [], []>} : vector<16x32xf32>, vector<32x96xf32>, vector<16x96xf32> -> vector<16x96xf32>
    %c0_6 = arith.constant 0 : index
    %c0_7 = arith.constant 0 : index
    %5 = vector.load %arg2[%c0_6, %c0_7] : memref<1x96xf32, #tpu.memory_space<vmem>>, vector<1x96xf32>
    %6 = vector.broadcast %5 : vector<1x96xf32> to vector<16x96xf32>
    %7 = arith.addf %4, %6 : vector<16x96xf32>
    %8 = vector.shape_cast %7 : vector<16x96xf32> to vector<2x8x96xf32>
    %cst_8 = arith.constant 0.000000e+00 : f32
    %9 = vector.broadcast %cst_8 : f32 to vector<16x32xf32>
    %10 = vector.extract_strided_slice %8 {offsets = [0, 0, 0], sizes = [2, 8, 8], strides = [1, 1, 1]} : vector<2x8x96xf32> to vector<2x8x8xf32>
    %cst_9 = arith.constant 0.353553385 : f32
    %11 = vector.broadcast %cst_9 : f32 to vector<2x8x8xf32>
    %12 = arith.mulf %10, %11 : vector<2x8x8xf32>
    %13 = vector.extract_strided_slice %8 {offsets = [0, 0, 32], sizes = [2, 8, 8], strides = [1, 1, 1]} : vector<2x8x96xf32> to vector<2x8x8xf32>
    %14 = vector.extract_strided_slice %8 {offsets = [0, 0, 64], sizes = [2, 8, 8], strides = [1, 1, 1]} : vector<2x8x96xf32> to vector<2x8x8xf32>
    "tpu.trace_start"() <{level = 10 : i32, message = "bqd,bkd->bqk"}> : () -> ()
    %cst_10 = arith.constant dense<0.000000e+00> : vector<2x8x8xf32>
    %15 = tpu.matmul %12, %13, %cst_10 {dimension_numbers = #tpu.dot_dimension_numbers<[2], [2], [1], [1], [0, 0, 0, 1, 1, 1], [0], [0]>} : vector<2x8x8xf32>, vector<2x8x8xf32>, vector<2x8x8xf32> -> vector<2x8x8xf32>
    "tpu.trace_stop"() : () -> ()
    %cst_11 = arith.constant dense<0xFF800000> : vector<2x8xf32>
    %16 = vector.multi_reduction <maximumf>, %15, %cst_11 [2] : vector<2x8x8xf32> to vector<2x8xf32>
    %17 = vector.shape_cast %16 : vector<2x8xf32> to vector<2x8x1xf32>
    %18 = vector.broadcast %17 : vector<2x8x1xf32> to vector<2x8x8xf32>
    %19 = arith.subf %15, %18 : vector<2x8x8xf32>
    %20 = math.exp %19 : vector<2x8x8xf32>
    %cst_12 = arith.constant dense<0.000000e+00> : vector<2x8xf32>
    %21 = vector.multi_reduction <add>, %20, %cst_12 [2] : vector<2x8x8xf32> to vector<2x8xf32>
    %22 = vector.shape_cast %21 : vector<2x8xf32> to vector<2x8x1xf32>
    %23 = tpu.reciprocal %22 {approx = true} : vector<2x8x1xf32> -> vector<2x8x1xf32>
    %24 = vector.broadcast %23 : vector<2x8x1xf32> to vector<2x8x8xf32>
    %25 = arith.mulf %20, %24 : vector<2x8x8xf32>
    "tpu.trace_start"() <{level = 10 : i32, message = "bqk,bkd->bqd"}> : () -> ()
    %cst_13 = arith.constant dense<0.000000e+00> : vector<2x8x8xf32>
    %26 = tpu.matmul %25, %14, %cst_13 {dimension_numbers = #tpu.dot_dimension_numbers<[2], [1], [1], [2], [0, 0, 0, 1, 1, 2], [0], [0]>} : vector<2x8x8xf32>, vector<2x8x8xf32>, vector<2x8x8xf32> -> vector<2x8x8xf32>
    "tpu.trace_stop"() : () -> ()
    %27 = vector.shape_cast %26 : vector<2x8x8xf32> to vector<16x8xf32>
    %28 = vector.extract_strided_slice %2 {offsets = [0, 0], sizes = [8, 32], strides = [1, 1]} : vector<32x32xf32> to vector<8x32xf32>
    %cst_14 = arith.constant dense<0.000000e+00> : vector<16x32xf32>
    %29 = tpu.matmul %27, %28, %cst_14 {dimension_numbers = #tpu.dot_dimension_numbers<[1], [0], [0], [1], [0, 0, 1, 1], [], []>} : vector<16x8xf32>, vector<8x32xf32>, vector<16x32xf32> -> vector<16x32xf32>
    %30 = arith.addf %9, %29 : vector<16x32xf32>
    %31 = vector.extract_strided_slice %8 {offsets = [0, 0, 8], sizes = [2, 8, 8], strides = [1, 1, 1]} : vector<2x8x96xf32> to vector<2x8x8xf32>
    %cst_15 = arith.constant 0.353553385 : f32
    %32 = vector.broadcast %cst_15 : f32 to vector<2x8x8xf32>
    %33 = arith.mulf %31, %32 : vector<2x8x8xf32>
    %34 = vector.extract_strided_slice %8 {offsets = [0, 0, 40], sizes = [2, 8, 8], strides = [1, 1, 1]} : vector<2x8x96xf32> to vector<2x8x8xf32>
    %35 = vector.extract_strided_slice %8 {offsets = [0, 0, 72], sizes = [2, 8, 8], strides = [1, 1, 1]} : vector<2x8x96xf32> to vector<2x8x8xf32>
    "tpu.trace_start"() <{level = 10 : i32, message = "bqd,bkd->bqk"}> : () -> ()
    %cst_16 = arith.constant dense<0.000000e+00> : vector<2x8x8xf32>
    %36 = tpu.matmul %33, %34, %cst_16 {dimension_numbers = #tpu.dot_dimension_numbers<[2], [2], [1], [1], [0, 0, 0, 1, 1, 1], [0], [0]>} : vector<2x8x8xf32>, vector<2x8x8xf32>, vector<2x8x8xf32> -> vector<2x8x8xf32>
    "tpu.trace_stop"() : () -> ()
    %cst_17 = arith.constant dense<0xFF800000> : vector<2x8xf32>
    %37 = vector.multi_reduction <maximumf>, %36, %cst_17 [2] : vector<2x8x8xf32> to vector<2x8xf32>
    %38 = vector.shape_cast %37 : vector<2x8xf32> to vector<2x8x1xf32>
    %39 = vector.broadcast %38 : vector<2x8x1xf32> to vector<2x8x8xf32>
    %40 = arith.subf %36, %39 : vector<2x8x8xf32>
    %41 = math.exp %40 : vector<2x8x8xf32>
    %cst_18 = arith.constant dense<0.000000e+00> : vector<2x8xf32>
    %42 = vector.multi_reduction <add>, %41, %cst_18 [2] : vector<2x8x8xf32> to vector<2x8xf32>
    %43 = vector.shape_cast %42 : vector<2x8xf32> to vector<2x8x1xf32>
    %44 = tpu.reciprocal %43 {approx = true} : vector<2x8x1xf32> -> vector<2x8x1xf32>
    %45 = vector.broadcast %44 : vector<2x8x1xf32> to vector<2x8x8xf32>
    %46 = arith.mulf %41, %45 : vector<2x8x8xf32>
    "tpu.trace_start"() <{level = 10 : i32, message = "bqk,bkd->bqd"}> : () -> ()
    %cst_19 = arith.constant dense<0.000000e+00> : vector<2x8x8xf32>
    %47 = tpu.matmul %46, %35, %cst_19 {dimension_numbers = #tpu.dot_dimension_numbers<[2], [1], [1], [2], [0, 0, 0, 1, 1, 2], [0], [0]>} : vector<2x8x8xf32>, vector<2x8x8xf32>, vector<2x8x8xf32> -> vector<2x8x8xf32>
    "tpu.trace_stop"() : () -> ()
    %48 = vector.shape_cast %47 : vector<2x8x8xf32> to vector<16x8xf32>
    %49 = vector.extract_strided_slice %2 {offsets = [8, 0], sizes = [8, 32], strides = [1, 1]} : vector<32x32xf32> to vector<8x32xf32>
    %cst_20 = arith.constant dense<0.000000e+00> : vector<16x32xf32>
    %50 = tpu.matmul %48, %49, %cst_20 {dimension_numbers = #tpu.dot_dimension_numbers<[1], [0], [0], [1], [0, 0, 1, 1], [], []>} : vector<16x8xf32>, vector<8x32xf32>, vector<16x32xf32> -> vector<16x32xf32>
    %51 = arith.addf %30, %50 : vector<16x32xf32>
    %52 = vector.extract_strided_slice %8 {offsets = [0, 0, 16], sizes = [2, 8, 8], strides = [1, 1, 1]} : vector<2x8x96xf32> to vector<2x8x8xf32>
    %cst_21 = arith.constant 0.353553385 : f32
    %53 = vector.broadcast %cst_21 : f32 to vector<2x8x8xf32>
    %54 = arith.mulf %52, %53 : vector<2x8x8xf32>
    %55 = vector.extract_strided_slice %8 {offsets = [0, 0, 48], sizes = [2, 8, 8], strides = [1, 1, 1]} : vector<2x8x96xf32> to vector<2x8x8xf32>
    %56 = vector.extract_strided_slice %8 {offsets = [0, 0, 80], sizes = [2, 8, 8], strides = [1, 1, 1]} : vector<2x8x96xf32> to vector<2x8x8xf32>
    "tpu.trace_start"() <{level = 10 : i32, message = "bqd,bkd->bqk"}> : () -> ()
    %cst_22 = arith.constant dense<0.000000e+00> : vector<2x8x8xf32>
    %57 = tpu.matmul %54, %55, %cst_22 {dimension_numbers = #tpu.dot_dimension_numbers<[2], [2], [1], [1], [0, 0, 0, 1, 1, 1], [0], [0]>} : vector<2x8x8xf32>, vector<2x8x8xf32>, vector<2x8x8xf32> -> vector<2x8x8xf32>
    "tpu.trace_stop"() : () -> ()
    %cst_23 = arith.constant dense<0xFF800000> : vector<2x8xf32>
    %58 = vector.multi_reduction <maximumf>, %57, %cst_23 [2] : vector<2x8x8xf32> to vector<2x8xf32>
    %59 = vector.shape_cast %58 : vector<2x8xf32> to vector<2x8x1xf32>
    %60 = vector.broadcast %59 : vector<2x8x1xf32> to vector<2x8x8xf32>
    %61 = arith.subf %57, %60 : vector<2x8x8xf32>
    %62 = math.exp %61 : vector<2x8x8xf32>
    %cst_24 = arith.constant dense<0.000000e+00> : vector<2x8xf32>
    %63 = vector.multi_reduction <add>, %62, %cst_24 [2] : vector<2x8x8xf32> to vector<2x8xf32>
    %64 = vector.shape_cast %63 : vector<2x8xf32> to vector<2x8x1xf32>
    %65 = tpu.reciprocal %64 {approx = true} : vector<2x8x1xf32> -> vector<2x8x1xf32>
    %66 = vector.broadcast %65 : vector<2x8x1xf32> to vector<2x8x8xf32>
    %67 = arith.mulf %62, %66 : vector<2x8x8xf32>
    "tpu.trace_start"() <{level = 10 : i32, message = "bqk,bkd->bqd"}> : () -> ()
    %cst_25 = arith.constant dense<0.000000e+00> : vector<2x8x8xf32>
    %68 = tpu.matmul %67, %56, %cst_25 {dimension_numbers = #tpu.dot_dimension_numbers<[2], [1], [1], [2], [0, 0, 0, 1, 1, 2], [0], [0]>} : vector<2x8x8xf32>, vector<2x8x8xf32>, vector<2x8x8xf32> -> vector<2x8x8xf32>
    "tpu.trace_stop"() : () -> ()
    %69 = vector.shape_cast %68 : vector<2x8x8xf32> to vector<16x8xf32>
    %70 = vector.extract_strided_slice %2 {offsets = [16, 0], sizes = [8, 32], strides = [1, 1]} : vector<32x32xf32> to vector<8x32xf32>
    %cst_26 = arith.constant dense<0.000000e+00> : vector<16x32xf32>
    %71 = tpu.matmul %69, %70, %cst_26 {dimension_numbers = #tpu.dot_dimension_numbers<[1], [0], [0], [1], [0, 0, 1, 1], [], []>} : vector<16x8xf32>, vector<8x32xf32>, vector<16x32xf32> -> vector<16x32xf32>
    %72 = arith.addf %51, %71 : vector<16x32xf32>
    %73 = vector.extract_strided_slice %8 {offsets = [0, 0, 24], sizes = [2, 8, 8], strides = [1, 1, 1]} : vector<2x8x96xf32> to vector<2x8x8xf32>
    %cst_27 = arith.constant 0.353553385 : f32
    %74 = vector.broadcast %cst_27 : f32 to vector<2x8x8xf32>
    %75 = arith.mulf %73, %74 : vector<2x8x8xf32>
    %76 = vector.extract_strided_slice %8 {offsets = [0, 0, 56], sizes = [2, 8, 8], strides = [1, 1, 1]} : vector<2x8x96xf32> to vector<2x8x8xf32>
    %77 = vector.extract_strided_slice %8 {offsets = [0, 0, 88], sizes = [2, 8, 8], strides = [1, 1, 1]} : vector<2x8x96xf32> to vector<2x8x8xf32>
    "tpu.trace_start"() <{level = 10 : i32, message = "bqd,bkd->bqk"}> : () -> ()
    %cst_28 = arith.constant dense<0.000000e+00> : vector<2x8x8xf32>
    %78 = tpu.matmul %75, %76, %cst_28 {dimension_numbers = #tpu.dot_dimension_numbers<[2], [2], [1], [1], [0, 0, 0, 1, 1, 1], [0], [0]>} : vector<2x8x8xf32>, vector<2x8x8xf32>, vector<2x8x8xf32> -> vector<2x8x8xf32>
    "tpu.trace_stop"() : () -> ()
    %cst_29 = arith.constant dense<0xFF800000> : vector<2x8xf32>
    %79 = vector.multi_reduction <maximumf>, %78, %cst_29 [2] : vector<2x8x8xf32> to vector<2x8xf32>
    %80 = vector.shape_cast %79 : vector<2x8xf32> to vector<2x8x1xf32>
    %81 = vector.broadcast %80 : vector<2x8x1xf32> to vector<2x8x8xf32>
    %82 = arith.subf %78, %81 : vector<2x8x8xf32>
    %83 = math.exp %82 : vector<2x8x8xf32>
    %cst_30 = arith.constant dense<0.000000e+00> : vector<2x8xf32>
    %84 = vector.multi_reduction <add>, %83, %cst_30 [2] : vector<2x8x8xf32> to vector<2x8xf32>
    %85 = vector.shape_cast %84 : vector<2x8xf32> to vector<2x8x1xf32>
    %86 = tpu.reciprocal %85 {approx = true} : vector<2x8x1xf32> -> vector<2x8x1xf32>
    %87 = vector.broadcast %86 : vector<2x8x1xf32> to vector<2x8x8xf32>
    %88 = arith.mulf %83, %87 : vector<2x8x8xf32>
    "tpu.trace_start"() <{level = 10 : i32, message = "bqk,bkd->bqd"}> : () -> ()
    %cst_31 = arith.constant dense<0.000000e+00> : vector<2x8x8xf32>
    %89 = tpu.matmul %88, %77, %cst_31 {dimension_numbers = #tpu.dot_dimension_numbers<[2], [1], [1], [2], [0, 0, 0, 1, 1, 2], [0], [0]>} : vector<2x8x8xf32>, vector<2x8x8xf32>, vector<2x8x8xf32> -> vector<2x8x8xf32>
    "tpu.trace_stop"() : () -> ()
    %90 = vector.shape_cast %89 : vector<2x8x8xf32> to vector<16x8xf32>
    %91 = vector.extract_strided_slice %2 {offsets = [24, 0], sizes = [8, 32], strides = [1, 1]} : vector<32x32xf32> to vector<8x32xf32>
    %cst_32 = arith.constant dense<0.000000e+00> : vector<16x32xf32>
    %92 = tpu.matmul %90, %91, %cst_32 {dimension_numbers = #tpu.dot_dimension_numbers<[1], [0], [0], [1], [0, 0, 1, 1], [], []>} : vector<16x8xf32>, vector<8x32xf32>, vector<16x32xf32> -> vector<16x32xf32>
    %93 = arith.addf %72, %92 : vector<16x32xf32>
    %c0_33 = arith.constant 0 : index
    %c0_34 = arith.constant 0 : index
    %94 = vector.load %arg4[%c0_33, %c0_34] : memref<1x32xf32, #tpu.memory_space<vmem>>, vector<1x32xf32>
    %95 = vector.broadcast %94 : vector<1x32xf32> to vector<16x32xf32>
    %96 = arith.addf %93, %95 : vector<16x32xf32>
    %97 = arith.addf %1, %96 : vector<16x32xf32>
    %c0_35 = arith.constant 0 : index
    %c0_36 = arith.constant 0 : index
    %98 = vector.load %arg9[%c0_35, %c0_36] : memref<1x32xf32, #tpu.memory_space<vmem>>, vector<1x32xf32>
    %c0_37 = arith.constant 0 : index
    %c0_38 = arith.constant 0 : index
    %99 = vector.load %arg10[%c0_37, %c0_38] : memref<1x32xf32, #tpu.memory_space<vmem>>, vector<1x32xf32>
    %cst_39 = arith.constant dense<0.000000e+00> : vector<16xf32>
    %100 = vector.multi_reduction <add>, %97, %cst_39 [1] : vector<16x32xf32> to vector<16xf32>
    %101 = vector.shape_cast %100 : vector<16xf32> to vector<16x1xf32>
    %cst_40 = arith.constant 3.200000e+01 : f32
    %102 = vector.broadcast %cst_40 : f32 to vector<16x1xf32>
    %103 = arith.divf %101, %102 : vector<16x1xf32>
    %104 = vector.broadcast %103 : vector<16x1xf32> to vector<16x32xf32>
    %105 = arith.subf %97, %104 : vector<16x32xf32>
    %106 = arith.mulf %105, %105 : vector<16x32xf32>
    %cst_41 = arith.constant dense<0.000000e+00> : vector<16xf32>
    %107 = vector.multi_reduction <add>, %106, %cst_41 [1] : vector<16x32xf32> to vector<16xf32>
    %108 = vector.shape_cast %107 : vector<16xf32> to vector<16x1xf32>
    %cst_42 = arith.constant 3.200000e+01 : f32
    %109 = vector.broadcast %cst_42 : f32 to vector<16x1xf32>
    %110 = arith.divf %108, %109 : vector<16x1xf32>
    %111 = vector.broadcast %103 : vector<16x1xf32> to vector<16x32xf32>
    %112 = arith.subf %97, %111 : vector<16x32xf32>
    %cst_43 = arith.constant 9.99999974E-6 : f32
    %113 = vector.broadcast %cst_43 : f32 to vector<16x1xf32>
    %114 = arith.addf %110, %113 : vector<16x1xf32>
    %115 = math.rsqrt %114 : vector<16x1xf32>
    %116 = vector.broadcast %115 : vector<16x1xf32> to vector<16x32xf32>
    %117 = arith.mulf %112, %116 : vector<16x32xf32>
    %118 = vector.broadcast %98 : vector<1x32xf32> to vector<16x32xf32>
    %119 = arith.mulf %117, %118 : vector<16x32xf32>
    %120 = vector.broadcast %99 : vector<1x32xf32> to vector<16x32xf32>
    %121 = arith.addf %119, %120 : vector<16x32xf32>
    %c0_44 = arith.constant 0 : index
    %c0_45 = arith.constant 0 : index
    %122 = vector.load %arg5[%c0_44, %c0_45] : memref<32x64xf32, #tpu.memory_space<vmem>>, vector<32x64xf32>
    %cst_46 = arith.constant dense<0.000000e+00> : vector<16x64xf32>
    %123 = tpu.matmul %121, %122, %cst_46 {dimension_numbers = #tpu.dot_dimension_numbers<[1], [0], [0], [1], [0, 0, 1, 1], [], []>} : vector<16x32xf32>, vector<32x64xf32>, vector<16x64xf32> -> vector<16x64xf32>
    %c0_47 = arith.constant 0 : index
    %c0_48 = arith.constant 0 : index
    %124 = vector.load %arg6[%c0_47, %c0_48] : memref<1x64xf32, #tpu.memory_space<vmem>>, vector<1x64xf32>
    %125 = vector.broadcast %124 : vector<1x64xf32> to vector<16x64xf32>
    %126 = arith.addf %123, %125 : vector<16x64xf32>
    %cst_49 = arith.constant 0.000000e+00 : f32
    %127 = vector.broadcast %cst_49 : f32 to vector<16x64xf32>
    %128 = arith.maximumf %126, %127 : vector<16x64xf32>
    %c0_50 = arith.constant 0 : index
    %c0_51 = arith.constant 0 : index
    %129 = vector.load %arg7[%c0_50, %c0_51] : memref<64x32xf32, #tpu.memory_space<vmem>>, vector<64x32xf32>
    %cst_52 = arith.constant dense<0.000000e+00> : vector<16x32xf32>
    %130 = tpu.matmul %128, %129, %cst_52 {dimension_numbers = #tpu.dot_dimension_numbers<[1], [0], [0], [1], [0, 0, 1, 1], [], []>} : vector<16x64xf32>, vector<64x32xf32>, vector<16x32xf32> -> vector<16x32xf32>
    %c0_53 = arith.constant 0 : index
    %c0_54 = arith.constant 0 : index
    %131 = vector.load %arg8[%c0_53, %c0_54] : memref<1x32xf32, #tpu.memory_space<vmem>>, vector<1x32xf32>
    %132 = vector.broadcast %131 : vector<1x32xf32> to vector<16x32xf32>
    %133 = arith.addf %130, %132 : vector<16x32xf32>
    %134 = arith.addf %121, %133 : vector<16x32xf32>
    %c0_55 = arith.constant 0 : index
    %c0_56 = arith.constant 0 : index
    %135 = vector.load %arg11[%c0_55, %c0_56] : memref<1x32xf32, #tpu.memory_space<vmem>>, vector<1x32xf32>
    %c0_57 = arith.constant 0 : index
    %c0_58 = arith.constant 0 : index
    %136 = vector.load %arg12[%c0_57, %c0_58] : memref<1x32xf32, #tpu.memory_space<vmem>>, vector<1x32xf32>
    %cst_59 = arith.constant dense<0.000000e+00> : vector<16xf32>
    %137 = vector.multi_reduction <add>, %134, %cst_59 [1] : vector<16x32xf32> to vector<16xf32>
    %138 = vector.shape_cast %137 : vector<16xf32> to vector<16x1xf32>
    %cst_60 = arith.constant 3.200000e+01 : f32
    %139 = vector.broadcast %cst_60 : f32 to vector<16x1xf32>
    %140 = arith.divf %138, %139 : vector<16x1xf32>
    %141 = vector.broadcast %140 : vector<16x1xf32> to vector<16x32xf32>
    %142 = arith.subf %134, %141 : vector<16x32xf32>
    %143 = arith.mulf %142, %142 : vector<16x32xf32>
    %cst_61 = arith.constant dense<0.000000e+00> : vector<16xf32>
    %144 = vector.multi_reduction <add>, %143, %cst_61 [1] : vector<16x32xf32> to vector<16xf32>
    %145 = vector.shape_cast %144 : vector<16xf32> to vector<16x1xf32>
    %cst_62 = arith.constant 3.200000e+01 : f32
    %146 = vector.broadcast %cst_62 : f32 to vector<16x1xf32>
    %147 = arith.divf %145, %146 : vector<16x1xf32>
    %148 = vector.broadcast %140 : vector<16x1xf32> to vector<16x32xf32>
    %149 = arith.subf %134, %148 : vector<16x32xf32>
    %cst_63 = arith.constant 9.99999974E-6 : f32
    %150 = vector.broadcast %cst_63 : f32 to vector<16x1xf32>
    %151 = arith.addf %147, %150 : vector<16x1xf32>
    %152 = math.rsqrt %151 : vector<16x1xf32>
    %153 = vector.broadcast %152 : vector<16x1xf32> to vector<16x32xf32>
    %154 = arith.mulf %149, %153 : vector<16x32xf32>
    %155 = vector.broadcast %135 : vector<1x32xf32> to vector<16x32xf32>
    %156 = arith.mulf %154, %155 : vector<16x32xf32>
    %157 = vector.broadcast %136 : vector<1x32xf32> to vector<16x32xf32>
    %158 = arith.addf %156, %157 : vector<16x32xf32>
    %159 = vector.shape_cast %158 : vector<16x32xf32> to vector<2x8x32xf32>
    %c0_64 = arith.constant 0 : index
    %c0_65 = arith.constant 0 : index
    %c0_66 = arith.constant 0 : index
    %160 = vector.load %arg13[%c0_64, %c0_65, %c0_66] : memref<2x8x32xf32, #tpu.memory_space<vmem>>, vector<2x8x32xf32>
    tpu.vector_store %arg13[%c0_64, %c0_65, %c0_66], %159 {strides = array<i32>} : memref<2x8x32xf32, #tpu.memory_space<vmem>>, vector<2x8x32xf32>,
    return
  }
}

</mosaic_0001>

<llo_original>
// kernel: tpu_custom_call.1
$region0: #{tpu_custom_call.1}
  #allocation0 [shape = 'u32[]', space=smem, size = 0x4, offset = 0x4, fixed_abs, tag = 'smem constant byte address 0x4 - core index']
  #allocation1 [shape = 'u32[144,128]{1,0:T(1,128)}', space=vmem, size = 0x12000, scoped, tag = 'internal scratch']
  %s0 = inlined_call_operand.hbm [shape: f32[2,8,32], index: 0, kind: input, shape index: {}]
  %s1 = inlined_call_operand.vmem [shape: f32[32,96], index: 1, kind: input, shape index: {}]
  %s2 = inlined_call_operand.vmem [shape: f32[1,96], index: 2, kind: input, shape index: {}]
  %s3 = inlined_call_operand.vmem [shape: f32[32,32], index: 3, kind: input, shape index: {}]
  %s4 = inlined_call_operand.vmem [shape: f32[1,32], index: 4, kind: input, shape index: {}]
  %s5 = inlined_call_operand.vmem [shape: f32[32,64], index: 5, kind: input, shape index: {}]
  %s6 = inlined_call_operand.vmem [shape: f32[1,64], index: 6, kind: input, shape index: {}]
  %s7 = inlined_call_operand.vmem [shape: f32[64,32], index: 7, kind: input, shape index: {}]
  %s8 = inlined_call_operand.vmem [shape: f32[1,32], index: 8, kind: input, shape index: {}]
  %s9 = inlined_call_operand.vmem [shape: f32[1,32], index: 9, kind: input, shape index: {}]
  %s10 = inlined_call_operand.vmem [shape: f32[1,32], index: 10, kind: input, shape index: {}]
  %s11 = inlined_call_operand.vmem [shape: f32[1,32], index: 11, kind: input, shape index: {}]
  %s12 = inlined_call_operand.vmem [shape: f32[1,32], index: 12, kind: input, shape index: {}]
  %s13 = inlined_call_operand.hbm [shape: f32[2,8,32], index: 13, kind: output, shape index: {}]
  %s14 = sld [smem:[#allocation0]]
  $region66: #{tpu_custom_call.1} parent=0
    _
  %s16 = ssub.s32 1, %s14
  %s17 = scalar_select 0, %s16, %s14
  $region1: #{tpu_custom_call.1} parent=0
    #allocation2 [shape = 'u8[8192]{0}', space=vmem, size = 0x2000, scoped, tag = 'input window, operand 0, single buffered']
    #allocation3 [shape = 's32[1]{0}', space=sflag, size = 0x4, scoped, tag = 'scoped memory for tpu_custom_call.1']
    #allocation4 [shape = 's32[1]{0}', space=sflag, size = 0x4, scoped, tag = 'scoped memory for tpu_custom_call.1']
    #allocation5 [shape = 'u8[8192]{0}', space=vmem, size = 0x2000, scoped, tag = 'output window, operand 0, single buffered']
    %18 = vsyncpa [#allocation3], 0
    %19 = vsyncpa [#allocation4], 0
    // Predicated region
    $region2: #{tpu_custom_call.1} parent=1 // pred_check
      _
    $region3: #{tpu_custom_call.1} parent=1 // pred_check_branch
      %21 = sbr.rel (0) target = $region5
    $region4: #{tpu_custom_call.1} parent=1 // pred_region
      %s23 = ssub.s32 256, 256
      %24 = vsyncadd [#allocation3], %s23
      %s25 = sshll.u32 [#allocation2], 4
      %s26 = int_to_ptr.vmem [resolvable:$true] %s25
      %31 = dma.hbm_to_vmem [thread:$0]  %s0, 256, %s26, [#allocation3], 128, 128, 8
    $region5: #{tpu_custom_call.1} parent=1 // pred_fallthru
      _
    // Predicated region
    $region6: #{tpu_custom_call.1} parent=1 // pred_check
      _
    $region7: #{tpu_custom_call.1} parent=1 // pred_check_branch
      %33 = sbr.rel (0) target = $region9
    $region8: #{tpu_custom_call.1} parent=1 // pred_region
      _
    $region9: #{tpu_custom_call.1} parent=1 // pred_fallthru
      _
    // Predicated region
    $region10: #{tpu_custom_call.1} parent=1 // pred_check
      _
    $region11: #{tpu_custom_call.1} parent=1 // pred_check_branch
      %35 = sbr.rel (0) target = $region13
    $region12: #{tpu_custom_call.1} parent=1 // pred_region
      _
    $region13: #{tpu_custom_call.1} parent=1 // pred_fallthru
      _
    // Predicated region
    $region14: #{tpu_custom_call.1} parent=1 // pred_check
      _
    $region15: #{tpu_custom_call.1} parent=1 // pred_check_branch
      %37 = sbr.rel (0) target = $region17
    $region16: #{tpu_custom_call.1} parent=1 // pred_region
      _
    $region17: #{tpu_custom_call.1} parent=1 // pred_fallthru
      _
    // Predicated region
    $region18: #{tpu_custom_call.1} parent=1 // pred_check
      _
    $region19: #{tpu_custom_call.1} parent=1 // pred_check_branch
      %39 = sbr.rel (0) target = $region21
    $region20: #{tpu_custom_call.1} parent=1 // pred_region
      _
    $region21: #{tpu_custom_call.1} parent=1 // pred_fallthru
      _
    // Predicated region
    $region22: #{tpu_custom_call.1} parent=1 // pred_check
      _
    $region23: #{tpu_custom_call.1} parent=1 // pred_check_branch
      %41 = sbr.rel (0) target = $region25
    $region24: #{tpu_custom_call.1} parent=1 // pred_region
      _
    $region25: #{tpu_custom_call.1} parent=1 // pred_fallthru
      _
    // Predicated region
    $region26: #{tpu_custom_call.1} parent=1 // pred_check
      _
    $region27: #{tpu_custom_call.1} parent=1 // pred_check_branch
      %43 = sbr.rel (0) target = $region29
    $region28: #{tpu_custom_call.1} parent=1 // pred_region
      _
    $region29: #{tpu_custom_call.1} parent=1 // pred_fallthru
      _
    // Predicated region
    $region30: #{tpu_custom_call.1} parent=1 // pred_check
      _
    $region31: #{tpu_custom_call.1} parent=1 // pred_check_branch
      %45 = sbr.rel (0) target = $region33
    $region32: #{tpu_custom_call.1} parent=1 // pred_region
      _
    $region33: #{tpu_custom_call.1} parent=1 // pred_fallthru
      _
    // Predicated region
    $region34: #{tpu_custom_call.1} parent=1 // pred_check
      _
    $region35: #{tpu_custom_call.1} parent=1 // pred_check_branch
      %47 = sbr.rel (0) target = $region37
    $region36: #{tpu_custom_call.1} parent=1 // pred_region
      _
    $region37: #{tpu_custom_call.1} parent=1 // pred_fallthru
      _
    // Predicated region
    $region38: #{tpu_custom_call.1} parent=1 // pred_check
      _
    $region39: #{tpu_custom_call.1} parent=1 // pred_check_branch
      %49 = sbr.rel (0) target = $region41
    $region40: #{tpu_custom_call.1} parent=1 // pred_region
      _
    $region41: #{tpu_custom_call.1} parent=1 // pred_fallthru
      _
    // Predicated region
    $region42: #{tpu_custom_call.1} parent=1 // pred_check
      _
    $region43: #{tpu_custom_call.1} parent=1 // pred_check_branch
      %51 = sbr.rel (0) target = $region45
    $region44: #{tpu_custom_call.1} parent=1 // pred_region
      _
    $region45: #{tpu_custom_call.1} parent=1 // pred_fallthru
      _
    // Predicated region
    $region46: #{tpu_custom_call.1} parent=1 // pred_check
      _
    $region47: #{tpu_custom_call.1} parent=1 // pred_check_branch
      %53 = sbr.rel (0) target = $region49
    $region48: #{tpu_custom_call.1} parent=1 // pred_region
      _
    $region49: #{tpu_custom_call.1} parent=1 // pred_fallthru
      _
    // Predicated region
    $region50: #{tpu_custom_call.1} parent=1 // pred_check
      _
    $region51: #{tpu_custom_call.1} parent=1 // pred_check_branch
      %55 = sbr.rel (0) target = $region53
    $region52: #{tpu_custom_call.1} parent=1 // pred_region
      _
    $region53: #{tpu_custom_call.1} parent=1 // pred_fallthru
      _
    // Predicated region
    $region54: #{tpu_custom_call.1} parent=1 // pred_check
      _
    $region55: #{tpu_custom_call.1} parent=1 // pred_check_branch
      %57 = sbr.rel (0) target = $region57
    $region56: #{tpu_custom_call.1} parent=1 // pred_region
      %58 = dma.done [#allocation3], 256
    $region57: #{tpu_custom_call.1} parent=1 // pred_fallthru
      _
    %v59 = vld [vmem:[#allocation2] sm:$0xff]
    %v60 = vld [vmem:[#allocation2 + $0x8] sm:$0xff]
    %v61 = vld [vmem:[%s3] sm:$0xff]
    %v62 = vld [vmem:[%s3 + $0x8] sm:$0xff]
    %v63 = vld [vmem:[%s3 + $0x10] sm:$0xff]
    %v64 = vld [vmem:[%s3 + $0x18] sm:$0xff]
    %v65 = vld [vmem:[%s1] sm:$0xff]
    %v66 = vld [vmem:[%s1 + $0x8] sm:$0xff]
    %v67 = vld [vmem:[%s1 + $0x10] sm:$0xff]
    %v68 = vld [vmem:[%s1 + $0x18] sm:$0xff]
    %v69 = vld [vmem:[%s2] sm:$0x1]
    %v71 = vlaneseq
    %v72 = vshrl.u32 %v71, 7
    %v73 = vsub.s32 0, %v72
    %v74 = vrot.slane %v69, %v73
    %vm76 = vcmask 261120
    %v78 = vsel %vm76, %v59, 0
    %v81 = vsel %vm76, %v60, 0
    %83 = vmatprep.subr.mxu0 0.0
    %84 = vmatpush1.msra.mxu0 0.0
    %85 = vmatprep.subr.mxu0 0.0
    %86 = vmatpush1.msra.mxu0 0.0
    %87 = vmatprep.subr.mxu0 0.0
    %88 = vmatpush1.msra.mxu0 0.0
    %89 = vmatprep.subr.mxu0 0.0
    %90 = vmatpush1.msra.mxu0 0.0
    %91 = vmatprep.subr.mxu0 0.0
    %92 = vmatpush1.msra.mxu0 0.0
    %93 = vmatprep.subr.mxu0 0.0
    %94 = vmatpush1.msra.mxu0 0.0
    %95 = vmatprep.subr.mxu0 0.0
    %96 = vmatpush1.msra.mxu0 0.0
    %97 = vmatprep.subr.mxu0 0.0
    %98 = vmatpush1.msra.mxu0 0.0
    %99 = vmatprep.subr.mxu0 0.0
    %100 = vmatpush1.msra.mxu0 0.0
    %101 = vmatprep.subr.mxu0 0.0
    %102 = vmatpush1.msra.mxu0 0.0
    %103 = vmatprep.subr.mxu0 0.0
    %104 = vmatpush1.msra.mxu0 0.0
    %105 = vmatprep.subr.mxu0 0.0
    %106 = vmatpush1.msra.mxu0 0.0
    %107 = vmatprep.subr.mxu0 0.0
    %108 = vmatpush1.msra.mxu0 %v68
    %109 = vmatprep.subr.mxu0 0.0
    %110 = vmatpush1.msra.mxu0 %v67
    %111 = vmatprep.subr.mxu0 0.0
    %112 = vmatpush1.msra.mxu0 %v66
    %113 = vmatprep.subr.mxu0 0.0
    %114 = vmatpush1.msra.mxu0 %v65
    %115 = vmatprep.subr.mxu0 0.0
    %116 = vmatpush2.msra.mxu0 0.0
    %117 = vmatprep.subr.mxu0 0.0
    %118 = vmatpush2.msra.mxu0 0.0
    %119 = vmatprep.subr.mxu0 0.0
    %120 = vmatpush2.msra.mxu0 0.0
    %121 = vmatprep.subr.mxu0 0.0
    %122 = vmatpush2.msra.mxu0 0.0
    %123 = vmatprep.subr.mxu0 0.0
    %124 = vmatpush2.msra.mxu0 0.0
    %125 = vmatprep.subr.mxu0 0.0
    %126 = vmatpush2.msra.mxu0 0.0
    %127 = vmatprep.subr.mxu0 0.0
    %128 = vmatpush2.msra.mxu0 0.0
    %129 = vmatprep.subr.mxu0 0.0
    %130 = vmatpush2.msra.mxu0 0.0
    %131 = vmatprep.subr.mxu0 0.0
    %132 = vmatpush2.msra.mxu0 0.0
    %133 = vmatprep.subr.mxu0 0.0
    %134 = vmatpush2.msra.mxu0 0.0
    %135 = vmatprep.subr.mxu0 0.0
    %136 = vmatpush2.msra.mxu0 0.0
    %137 = vmatprep.subr.mxu0 0.0
    %138 = vmatpush2.msra.mxu0 0.0
    %139 = vmatprep.subr.mxu0 0.0
    %140 = vmatpush2.msra.mxu0 0.0
    %141 = vmatprep.subr.mxu0 0.0
    %142 = vmatpush2.msra.mxu0 0.0
    %143 = vmatprep.subr.mxu0 0.0
    %144 = vmatpush2.msra.mxu0 0.0
    %145 = vmatprep.subr.mxu0 0.0
    %146 = vmatpush2.msra.mxu0 0.0
    %147 = vmatprep.mubr.f32.mxu0 0.0
    %148 = vmatmul.mubr.f32.gmra.mxu0 %v78
    %v149 = vpop.f32.mrf.mxu0
    %v150 = vadd.f32 %v74, %v149
    %v151 = vpop.f32.mrf.mxu0
    %152 = vmatprep.mubr.f32.mxu0 0.0
    %153 = vmatmul.mubr.f32.gmra.mxu0 %v81
    %v154 = vpop.f32.mrf.mxu0
    %v155 = vadd.f32 %v74, %v154
    %v156 = vpop.f32.mrf.mxu0
    %157 = vdwg.mxu0
    %v158 = vmul.f32 %v150, 0.35355338
    %v159 = vmul.f32 %v155, 0.35355338
    %161 = vrot.lane.b32.xlu0 %v150, 96
    %v162 = vpop.permute.xlu0 %161
    %vm163 = vcmask 64512
    %v165 = vsel %vm163, %v158, 0
    %v167 = vsel %vm163, %v162, 0
    %169 = vmatprep.subr.mxu0 0.0
    %170 = vmatpush1.xpose.msra.mxu0 0.0
    %171 = vmatprep.subr.mxu0 0.0
    %172 = vmatpush1.xpose.msra.mxu0 0.0
    %173 = vmatprep.subr.mxu0 0.0
    %174 = vmatpush1.xpose.msra.mxu0 0.0
    %175 = vmatprep.subr.mxu0 0.0
    %176 = vmatpush1.xpose.msra.mxu0 0.0
    %177 = vmatprep.subr.mxu0 0.0
    %178 = vmatpush1.xpose.msra.mxu0 0.0
    %179 = vmatprep.subr.mxu0 0.0
    %180 = vmatpush1.xpose.msra.mxu0 0.0
    %181 = vmatprep.subr.mxu0 0.0
    %182 = vmatpush1.xpose.msra.mxu0 0.0
    %183 = vmatprep.subr.mxu0 0.0
    %184 = vmatpush1.xpose.msra.mxu0 0.0
    %185 = vmatprep.subr.mxu0 0.0
    %186 = vmatpush1.xpose.msra.mxu0 0.0
    %187 = vmatprep.subr.mxu0 0.0
    %188 = vmatpush1.xpose.msra.mxu0 0.0
    %189 = vmatprep.subr.mxu0 0.0
    %190 = vmatpush1.xpose.msra.mxu0 0.0
    %191 = vmatprep.subr.mxu0 0.0
    %192 = vmatpush1.xpose.msra.mxu0 0.0
    %193 = vmatprep.subr.mxu0 0.0
    %194 = vmatpush1.xpose.msra.mxu0 0.0
    %195 = vmatprep.subr.mxu0 0.0
    %196 = vmatpush1.xpose.msra.mxu0 0.0
    %197 = vmatprep.subr.mxu0 0.0
    %198 = vmatpush1.xpose.msra.mxu0 0.0
    %199 = vmatprep.subr.mxu0 0.0
    %200 = vmatpush1.xpose.msra.mxu0 %v167
    %201 = vmatprep.subr.mxu0 0.0
    %202 = vmatpush2.xpose.msra.mxu0 0.0
    %203 = vmatprep.subr.mxu0 0.0
    %204 = vmatpush2.xpose.msra.mxu0 0.0
    %205 = vmatprep.subr.mxu0 0.0
    %206 = vmatpush2.xpose.msra.mxu0 0.0
    %207 = vmatprep.subr.mxu0 0.0
    %208 = vmatpush2.xpose.msra.mxu0 0.0
    %209 = vmatprep.subr.mxu0 0.0
    %210 = vmatpush2.xpose.msra.mxu0 0.0
    %211 = vmatprep.subr.mxu0 0.0
    %212 = vmatpush2.xpose.msra.mxu0 0.0
    %213 = vmatprep.subr.mxu0 0.0
    %214 = vmatpush2.xpose.msra.mxu0 0.0
    %215 = vmatprep.subr.mxu0 0.0
    %216 = vmatpush2.xpose.msra.mxu0 0.0
    %217 = vmatprep.subr.mxu0 0.0
    %218 = vmatpush2.xpose.msra.mxu0 0.0
    %219 = vmatprep.subr.mxu0 0.0
    %220 = vmatpush2.xpose.msra.mxu0 0.0
    %221 = vmatprep.subr.mxu0 0.0
    %222 = vmatpush2.xpose.msra.mxu0 0.0
    %223 = vmatprep.subr.mxu0 0.0
    %224 = vmatpush2.xpose.msra.mxu0 0.0
    %225 = vmatprep.subr.mxu0 0.0
    %226 = vmatpush2.xpose.msra.mxu0 0.0
    %227 = vmatprep.subr.mxu0 0.0
    %228 = vmatpush2.xpose.msra.mxu0 0.0
    %229 = vmatprep.subr.mxu0 0.0
    %230 = vmatpush2.xpose.msra.mxu0 0.0
    %231 = vmatprep.subr.mxu0 0.0
    %232 = vmatpush2.xpose.msra.mxu0 0.0
    %233 = vmatprep.mubr.f32.mxu0 0.0
    %234 = vmatmul.mubr.f32.gmra.mxu0 %v165
    %v235 = vpop.f32.mrf.mxu0
    %v236 = vadd.f32 0.0, %v235
    %v237 = vpop.f32.mrf.mxu0
    %238 = vdwg.mxu0
    %240 = vrot.lane.b32.xlu0 %v155, 96
    %v241 = vpop.permute.xlu0 %240
    %v243 = vsel %vm163, %v159, 0
    %v245 = vsel %vm163, %v241, 0
    %247 = vmatprep.subr.mxu0 0.0
    %248 = vmatpush1.xpose.msra.mxu0 0.0
    %249 = vmatprep.subr.mxu0 0.0
    %250 = vmatpush1.xpose.msra.mxu0 0.0
    %251 = vmatprep.subr.mxu0 0.0
    %252 = vmatpush1.xpose.msra.mxu0 0.0
    %253 = vmatprep.subr.mxu0 0.0
    %254 = vmatpush1.xpose.msra.mxu0 0.0
    %255 = vmatprep.subr.mxu0 0.0
    %256 = vmatpush1.xpose.msra.mxu0 0.0
    %257 = vmatprep.subr.mxu0 0.0
    %258 = vmatpush1.xpose.msra.mxu0 0.0
    %259 = vmatprep.subr.mxu0 0.0
    %260 = vmatpush1.xpose.msra.mxu0 0.0
    %261 = vmatprep.subr.mxu0 0.0
    %262 = vmatpush1.xpose.msra.mxu0 0.0
    %263 = vmatprep.subr.mxu0 0.0
    %264 = vmatpush1.xpose.msra.mxu0 0.0
    %265 = vmatprep.subr.mxu0 0.0
    %266 = vmatpush1.xpose.msra.mxu0 0.0
    %267 = vmatprep.subr.mxu0 0.0
    %268 = vmatpush1.xpose.msra.mxu0 0.0
    %269 = vmatprep.subr.mxu0 0.0
    %270 = vmatpush1.xpose.msra.mxu0 0.0
    %271 = vmatprep.subr.mxu0 0.0
    %272 = vmatpush1.xpose.msra.mxu0 0.0
    %273 = vmatprep.subr.mxu0 0.0
    %274 = vmatpush1.xpose.msra.mxu0 0.0
    %275 = vmatprep.subr.mxu0 0.0
    %276 = vmatpush1.xpose.msra.mxu0 0.0
    %277 = vmatprep.subr.mxu0 0.0
    %278 = vmatpush1.xpose.msra.mxu0 %v245
    %279 = vmatprep.subr.mxu0 0.0
    %280 = vmatpush2.xpose.msra.mxu0 0.0
    %281 = vmatprep.subr.mxu0 0.0
    %282 = vmatpush2.xpose.msra.mxu0 0.0
    %283 = vmatprep.subr.mxu0 0.0
    %284 = vmatpush2.xpose.msra.mxu0 0.0
    %285 = vmatprep.subr.mxu0 0.0
    %286 = vmatpush2.xpose.msra.mxu0 0.0
    %287 = vmatprep.subr.mxu0 0.0
    %288 = vmatpush2.xpose.msra.mxu0 0.0
    %289 = vmatprep.subr.mxu0 0.0
    %290 = vmatpush2.xpose.msra.mxu0 0.0
    %291 = vmatprep.subr.mxu0 0.0
    %292 = vmatpush2.xpose.msra.mxu0 0.0
    %293 = vmatprep.subr.mxu0 0.0
    %294 = vmatpush2.xpose.msra.mxu0 0.0
    %295 = vmatprep.subr.mxu0 0.0
    %296 = vmatpush2.xpose.msra.mxu0 0.0
    %297 = vmatprep.subr.mxu0 0.0
    %298 = vmatpush2.xpose.msra.mxu0 0.0
    %299 = vmatprep.subr.mxu0 0.0
    %300 = vmatpush2.xpose.msra.mxu0 0.0
    %301 = vmatprep.subr.mxu0 0.0
    %302 = vmatpush2.xpose.msra.mxu0 0.0
    %303 = vmatprep.subr.mxu0 0.0
    %304 = vmatpush2.xpose.msra.mxu0 0.0
    %305 = vmatprep.subr.mxu0 0.0
    %306 = vmatpush2.xpose.msra.mxu0 0.0
    %307 = vmatprep.subr.mxu0 0.0
    %308 = vmatpush2.xpose.msra.mxu0 0.0
    %309 = vmatprep.subr.mxu0 0.0
    %310 = vmatpush2.xpose.msra.mxu0 0.0
    %311 = vmatprep.mubr.f32.mxu0 0.0
    %312 = vmatmul.mubr.f32.gmra.mxu0 %v243
    %v313 = vpop.f32.mrf.mxu0
    %v314 = vadd.f32 0.0, %v313
    %v315 = vpop.f32.mrf.mxu0
    %316 = vdwg.mxu0
    %v317 = vsel %vm163, %v236, -inf
    %318 = vmax.xlane.f32.xlu0 %v317
    %v319 = vpop.xlane.xlu0 %318
    %v320 = vsel %vm163, %v314, -inf
    %321 = vmax.xlane.f32.xlu0 %v320
    %v322 = vpop.xlane.xlu0 %321
    %v323 = vsub.f32 %v236, %v319
    %v324 = vsub.f32 %v314, %v322
    %v325 = vmul.f32 %v323, 1.442695
    %v326 = vpow.pop %v325
    %v327 = vmul.f32 %v324, 1.442695
    %v328 = vpow.pop %v327
    %v329 = vsel %vm163, %v326, 0.0
    %330 = vadd.xlane.f32.xlu0 %v329
    %v331 = vpop.xlane.xlu0 %330
    %v332 = vsel %vm163, %v328, 0.0
    %333 = vadd.xlane.f32.xlu0 %v332
    %v334 = vpop.xlane.xlu0 %333
    %v335 = vrcp.pop %v331
    %v336 = vrcp.pop %v334
    %v337 = vmul.f32 %v326, %v335
    %v338 = vmul.f32 %v328, %v336
    %339 = vrot.lane.b32.xlu0 %v150, 64
    %v340 = vpop.permute.xlu0 %339
    %v343 = vsel %vm163, %v337, 0
    %345 = vmatprep.subr.mxu0 0.0
    %346 = vmatpush1.msra.mxu0 0.0
    %347 = vmatprep.subr.mxu0 0.0
    %348 = vmatpush1.msra.mxu0 0.0
    %349 = vmatprep.subr.mxu0 0.0
    %350 = vmatpush1.msra.mxu0 0.0
    %351 = vmatprep.subr.mxu0 0.0
    %352 = vmatpush1.msra.mxu0 0.0
    %353 = vmatprep.subr.mxu0 0.0
    %354 = vmatpush1.msra.mxu0 0.0
    %355 = vmatprep.subr.mxu0 0.0
    %356 = vmatpush1.msra.mxu0 0.0
    %357 = vmatprep.subr.mxu0 0.0
    %358 = vmatpush1.msra.mxu0 0.0
    %359 = vmatprep.subr.mxu0 0.0
    %360 = vmatpush1.msra.mxu0 0.0
    %361 = vmatprep.subr.mxu0 0.0
    %362 = vmatpush1.msra.mxu0 0.0
    %363 = vmatprep.subr.mxu0 0.0
    %364 = vmatpush1.msra.mxu0 0.0
    %365 = vmatprep.subr.mxu0 0.0
    %366 = vmatpush1.msra.mxu0 0.0
    %367 = vmatprep.subr.mxu0 0.0
    %368 = vmatpush1.msra.mxu0 0.0
    %369 = vmatprep.subr.mxu0 0.0
    %370 = vmatpush1.msra.mxu0 0.0
    %371 = vmatprep.subr.mxu0 0.0
    %372 = vmatpush1.msra.mxu0 0.0
    %373 = vmatprep.subr.mxu0 0.0
    %374 = vmatpush1.msra.mxu0 0.0
    %375 = vmatprep.subr.mxu0 0.0
    %376 = vmatpush1.msra.mxu0 %v340
    %377 = vmatprep.subr.mxu0 0.0
    %378 = vmatpush2.msra.mxu0 0.0
    %379 = vmatprep.subr.mxu0 0.0
    %380 = vmatpush2.msra.mxu0 0.0
    %381 = vmatprep.subr.mxu0 0.0
    %382 = vmatpush2.msra.mxu0 0.0
    %383 = vmatprep.subr.mxu0 0.0
    %384 = vmatpush2.msra.mxu0 0.0
    %385 = vmatprep.subr.mxu0 0.0
    %386 = vmatpush2.msra.mxu0 0.0
    %387 = vmatprep.subr.mxu0 0.0
    %388 = vmatpush2.msra.mxu0 0.0
    %389 = vmatprep.subr.mxu0 0.0
    %390 = vmatpush2.msra.mxu0 0.0
    %391 = vmatprep.subr.mxu0 0.0
    %392 = vmatpush2.msra.mxu0 0.0
    %393 = vmatprep.subr.mxu0 0.0
    %394 = vmatpush2.msra.mxu0 0.0
    %395 = vmatprep.subr.mxu0 0.0
    %396 = vmatpush2.msra.mxu0 0.0
    %397 = vmatprep.subr.mxu0 0.0
    %398 = vmatpush2.msra.mxu0 0.0
    %399 = vmatprep.subr.mxu0 0.0
    %400 = vmatpush2.msra.mxu0 0.0
    %401 = vmatprep.subr.mxu0 0.0
    %402 = vmatpush2.msra.mxu0 0.0
    %403 = vmatprep.subr.mxu0 0.0
    %404 = vmatpush2.msra.mxu0 0.0
    %405 = vmatprep.subr.mxu0 0.0
    %406 = vmatpush2.msra.mxu0 0.0
    %407 = vmatprep.subr.mxu0 0.0
    %408 = vmatpush2.msra.mxu0 0.0
    %409 = vmatprep.mubr.f32.mxu0 0.0
    %410 = vmatmul.mubr.f32.gmra.mxu0 %v343
    %v411 = vpop.f32.mrf.mxu0
    %v412 = vadd.f32 0.0, %v411
    %v413 = vpop.f32.mrf.mxu0
    %414 = vdwg.mxu0
    %415 = vrot.lane.b32.xlu0 %v155, 64
    %v416 = vpop.permute.xlu0 %415
    %v419 = vsel %vm163, %v338, 0
    %421 = vmatprep.subr.mxu0 0.0
    %422 = vmatpush1.msra.mxu0 0.0
    %423 = vmatprep.subr.mxu0 0.0
    %424 = vmatpush1.msra.mxu0 0.0
    %425 = vmatprep.subr.mxu0 0.0
    %426 = vmatpush1.msra.mxu0 0.0
    %427 = vmatprep.subr.mxu0 0.0
    %428 = vmatpush1.msra.mxu0 0.0
    %429 = vmatprep.subr.mxu0 0.0
    %430 = vmatpush1.msra.mxu0 0.0
    %431 = vmatprep.subr.mxu0 0.0
    %432 = vmatpush1.msra.mxu0 0.0
    %433 = vmatprep.subr.mxu0 0.0
    %434 = vmatpush1.msra.mxu0 0.0
    %435 = vmatprep.subr.mxu0 0.0
    %436 = vmatpush1.msra.mxu0 0.0
    %437 = vmatprep.subr.mxu0 0.0
    %438 = vmatpush1.msra.mxu0 0.0
    %439 = vmatprep.subr.mxu0 0.0
    %440 = vmatpush1.msra.mxu0 0.0
    %441 = vmatprep.subr.mxu0 0.0
    %442 = vmatpush1.msra.mxu0 0.0
    %443 = vmatprep.subr.mxu0 0.0
    %444 = vmatpush1.msra.mxu0 0.0
    %445 = vmatprep.subr.mxu0 0.0
    %446 = vmatpush1.msra.mxu0 0.0
    %447 = vmatprep.subr.mxu0 0.0
    %448 = vmatpush1.msra.mxu0 0.0
    %449 = vmatprep.subr.mxu0 0.0
    %450 = vmatpush1.msra.mxu0 0.0
    %451 = vmatprep.subr.mxu0 0.0
    %452 = vmatpush1.msra.mxu0 %v416
    %453 = vmatprep.subr.mxu0 0.0
    %454 = vmatpush2.msra.mxu0 0.0
    %455 = vmatprep.subr.mxu0 0.0
    %456 = vmatpush2.msra.mxu0 0.0
    %457 = vmatprep.subr.mxu0 0.0
    %458 = vmatpush2.msra.mxu0 0.0
    %459 = vmatprep.subr.mxu0 0.0
    %460 = vmatpush2.msra.mxu0 0.0
    %461 = vmatprep.subr.mxu0 0.0
    %462 = vmatpush2.msra.mxu0 0.0
    %463 = vmatprep.subr.mxu0 0.0
    %464 = vmatpush2.msra.mxu0 0.0
    %465 = vmatprep.subr.mxu0 0.0
    %466 = vmatpush2.msra.mxu0 0.0
    %467 = vmatprep.subr.mxu0 0.0
    %468 = vmatpush2.msra.mxu0 0.0
    %469 = vmatprep.subr.mxu0 0.0
    %470 = vmatpush2.msra.mxu0 0.0
    %471 = vmatprep.subr.mxu0 0.0
    %472 = vmatpush2.msra.mxu0 0.0
    %473 = vmatprep.subr.mxu0 0.0
    %474 = vmatpush2.msra.mxu0 0.0
    %475 = vmatprep.subr.mxu0 0.0
    %476 = vmatpush2.msra.mxu0 0.0
    %477 = vmatprep.subr.mxu0 0.0
    %478 = vmatpush2.msra.mxu0 0.0
    %479 = vmatprep.subr.mxu0 0.0
    %480 = vmatpush2.msra.mxu0 0.0
    %481 = vmatprep.subr.mxu0 0.0
    %482 = vmatpush2.msra.mxu0 0.0
    %483 = vmatprep.subr.mxu0 0.0
    %484 = vmatpush2.msra.mxu0 0.0
    %485 = vmatprep.mubr.f32.mxu0 0.0
    %486 = vmatmul.mubr.f32.gmra.mxu0 %v419
    %v487 = vpop.f32.mrf.mxu0
    %v488 = vadd.f32 0.0, %v487
    %v489 = vpop.f32.mrf.mxu0
    %490 = vdwg.mxu0
    %491 = vrot.lane.b32.xlu0 %v158, 120
    %v492 = vpop.permute.xlu0 %491
    %493 = vrot.lane.b32.xlu0 %v150, 88
    %v494 = vpop.permute.xlu0 %493
    %v495 = vsel %vm163, %v492, 0
    %v497 = vsel %vm163, %v494, 0
    %499 = vmatprep.subr.mxu0 0.0
    %500 = vmatpush1.xpose.msra.mxu0 0.0
    %501 = vmatprep.subr.mxu0 0.0
    %502 = vmatpush1.xpose.msra.mxu0 0.0
    %503 = vmatprep.subr.mxu0 0.0
    %504 = vmatpush1.xpose.msra.mxu0 0.0
    %505 = vmatprep.subr.mxu0 0.0
    %506 = vmatpush1.xpose.msra.mxu0 0.0
    %507 = vmatprep.subr.mxu0 0.0
    %508 = vmatpush1.xpose.msra.mxu0 0.0
    %509 = vmatprep.subr.mxu0 0.0
    %510 = vmatpush1.xpose.msra.mxu0 0.0
    %511 = vmatprep.subr.mxu0 0.0
    %512 = vmatpush1.xpose.msra.mxu0 0.0
    %513 = vmatprep.subr.mxu0 0.0
    %514 = vmatpush1.xpose.msra.mxu0 0.0
    %515 = vmatprep.subr.mxu0 0.0
    %516 = vmatpush1.xpose.msra.mxu0 0.0
    %517 = vmatprep.subr.mxu0 0.0
    %518 = vmatpush1.xpose.msra.mxu0 0.0
    %519 = vmatprep.subr.mxu0 0.0
    %520 = vmatpush1.xpose.msra.mxu0 0.0
    %521 = vmatprep.subr.mxu0 0.0
    %522 = vmatpush1.xpose.msra.mxu0 0.0
    %523 = vmatprep.subr.mxu0 0.0
    %524 = vmatpush1.xpose.msra.mxu0 0.0
    %525 = vmatprep.subr.mxu0 0.0
    %526 = vmatpush1.xpose.msra.mxu0 0.0
    %527 = vmatprep.subr.mxu0 0.0
    %528 = vmatpush1.xpose.msra.mxu0 0.0
    %529 = vmatprep.subr.mxu0 0.0
    %530 = vmatpush1.xpose.msra.mxu0 %v497
    %531 = vmatprep.subr.mxu0 0.0
    %532 = vmatpush2.xpose.msra.mxu0 0.0
    %533 = vmatprep.subr.mxu0 0.0
    %534 = vmatpush2.xpose.msra.mxu0 0.0
    %535 = vmatprep.subr.mxu0 0.0
    %536 = vmatpush2.xpose.msra.mxu0 0.0
    %537 = vmatprep.subr.mxu0 0.0
    %538 = vmatpush2.xpose.msra.mxu0 0.0
    %539 = vmatprep.subr.mxu0 0.0
    %540 = vmatpush2.xpose.msra.mxu0 0.0
    %541 = vmatprep.subr.mxu0 0.0
    %542 = vmatpush2.xpose.msra.mxu0 0.0
    %543 = vmatprep.subr.mxu0 0.0
    %544 = vmatpush2.xpose.msra.mxu0 0.0
    %545 = vmatprep.subr.mxu0 0.0
    %546 = vmatpush2.xpose.msra.mxu0 0.0
    %547 = vmatprep.subr.mxu0 0.0
    %548 = vmatpush2.xpose.msra.mxu0 0.0
    %549 = vmatprep.subr.mxu0 0.0
    %550 = vmatpush2.xpose.msra.mxu0 0.0
    %551 = vmatprep.subr.mxu0 0.0
    %552 = vmatpush2.xpose.msra.mxu0 0.0
    %553 = vmatprep.subr.mxu0 0.0
    %554 = vmatpush2.xpose.msra.mxu0 0.0
    %555 = vmatprep.subr.mxu0 0.0
    %556 = vmatpush2.xpose.msra.mxu0 0.0
    %557 = vmatprep.subr.mxu0 0.0
    %558 = vmatpush2.xpose.msra.mxu0 0.0
    %559 = vmatprep.subr.mxu0 0.0
    %560 = vmatpush2.xpose.msra.mxu0 0.0
    %561 = vmatprep.subr.mxu0 0.0
    %562 = vmatpush2.xpose.msra.mxu0 0.0
    %563 = vmatprep.mubr.f32.mxu0 0.0
    %564 = vmatmul.mubr.f32.gmra.mxu0 %v495
    %v565 = vpop.f32.mrf.mxu0
    %v566 = vadd.f32 0.0, %v565
    %v567 = vpop.f32.mrf.mxu0
    %568 = vdwg.mxu0
    %569 = vrot.lane.b32.xlu0 %v159, 120
    %v570 = vpop.permute.xlu0 %569
    %571 = vrot.lane.b32.xlu0 %v155, 88
    %v572 = vpop.permute.xlu0 %571
    %v573 = vsel %vm163, %v570, 0
    %v575 = vsel %vm163, %v572, 0
    %577 = vmatprep.subr.mxu0 0.0
    %578 = vmatpush1.xpose.msra.mxu0 0.0
    %579 = vmatprep.subr.mxu0 0.0
    %580 = vmatpush1.xpose.msra.mxu0 0.0
    %581 = vmatprep.subr.mxu0 0.0
    %582 = vmatpush1.xpose.msra.mxu0 0.0
    %583 = vmatprep.subr.mxu0 0.0
    %584 = vmatpush1.xpose.msra.mxu0 0.0
    %585 = vmatprep.subr.mxu0 0.0
    %586 = vmatpush1.xpose.msra.mxu0 0.0
    %587 = vmatprep.subr.mxu0 0.0
    %588 = vmatpush1.xpose.msra.mxu0 0.0
    %589 = vmatprep.subr.mxu0 0.0
    %590 = vmatpush1.xpose.msra.mxu0 0.0
    %591 = vmatprep.subr.mxu0 0.0
    %592 = vmatpush1.xpose.msra.mxu0 0.0
    %593 = vmatprep.subr.mxu0 0.0
    %594 = vmatpush1.xpose.msra.mxu0 0.0
    %595 = vmatprep.subr.mxu0 0.0
    %596 = vmatpush1.xpose.msra.mxu0 0.0
    %597 = vmatprep.subr.mxu0 0.0
    %598 = vmatpush1.xpose.msra.mxu0 0.0
    %599 = vmatprep.subr.mxu0 0.0
    %600 = vmatpush1.xpose.msra.mxu0 0.0
    %601 = vmatprep.subr.mxu0 0.0
    %602 = vmatpush1.xpose.msra.mxu0 0.0
    %603 = vmatprep.subr.mxu0 0.0
    %604 = vmatpush1.xpose.msra.mxu0 0.0
    %605 = vmatprep.subr.mxu0 0.0
    %606 = vmatpush1.xpose.msra.mxu0 0.0
    %607 = vmatprep.subr.mxu0 0.0
    %608 = vmatpush1.xpose.msra.mxu0 %v575
    %609 = vmatprep.subr.mxu0 0.0
    %610 = vmatpush2.xpose.msra.mxu0 0.0
    %611 = vmatprep.subr.mxu0 0.0
    %612 = vmatpush2.xpose.msra.mxu0 0.0
    %613 = vmatprep.subr.mxu0 0.0
    %614 = vmatpush2.xpose.msra.mxu0 0.0
    %615 = vmatprep.subr.mxu0 0.0
    %616 = vmatpush2.xpose.msra.mxu0 0.0
    %617 = vmatprep.subr.mxu0 0.0
    %618 = vmatpush2.xpose.msra.mxu0 0.0
    %619 = vmatprep.subr.mxu0 0.0
    %620 = vmatpush2.xpose.msra.mxu0 0.0
    %621 = vmatprep.subr.mxu0 0.0
    %622 = vmatpush2.xpose.msra.mxu0 0.0
    %623 = vmatprep.subr.mxu0 0.0
    %624 = vmatpush2.xpose.msra.mxu0 0.0
    %625 = vmatprep.subr.mxu0 0.0
    %626 = vmatpush2.xpose.msra.mxu0 0.0
    %627 = vmatprep.subr.mxu0 0.0
    %628 = vmatpush2.xpose.msra.mxu0 0.0
    %629 = vmatprep.subr.mxu0 0.0
    %630 = vmatpush2.xpose.msra.mxu0 0.0
    %631 = vmatprep.subr.mxu0 0.0
    %632 = vmatpush2.xpose.msra.mxu0 0.0
    %633 = vmatprep.subr.mxu0 0.0
    %634 = vmatpush2.xpose.msra.mxu0 0.0
    %635 = vmatprep.subr.mxu0 0.0
    %636 = vmatpush2.xpose.msra.mxu0 0.0
    %637 = vmatprep.subr.mxu0 0.0
    %638 = vmatpush2.xpose.msra.mxu0 0.0
    %639 = vmatprep.subr.mxu0 0.0
    %640 = vmatpush2.xpose.msra.mxu0 0.0
    %641 = vmatprep.mubr.f32.mxu0 0.0
    %642 = vmatmul.mubr.f32.gmra.mxu0 %v573
    %v643 = vpop.f32.mrf.mxu0
    %v644 = vadd.f32 0.0, %v643
    %v645 = vpop.f32.mrf.mxu0
    %646 = vdwg.mxu0
    %v647 = vsel %vm163, %v566, -inf
    %648 = vmax.xlane.f32.xlu0 %v647
    %v649 = vpop.xlane.xlu0 %648
    %v650 = vsel %vm163, %v644, -inf
    %651 = vmax.xlane.f32.xlu0 %v650
    %v652 = vpop.xlane.xlu0 %651
    %v653 = vsub.f32 %v566, %v649
    %v654 = vsub.f32 %v644, %v652
    %v655 = vmul.f32 %v653, 1.442695
    %v656 = vpow.pop %v655
    %v657 = vmul.f32 %v654, 1.442695
    %v658 = vpow.pop %v657
    %v659 = vsel %vm163, %v656, 0.0
    %660 = vadd.xlane.f32.xlu0 %v659
    %v661 = vpop.xlane.xlu0 %660
    %v662 = vsel %vm163, %v658, 0.0
    %663 = vadd.xlane.f32.xlu0 %v662
    %v664 = vpop.xlane.xlu0 %663
    %v665 = vrcp.pop %v661
    %v666 = vrcp.pop %v664
    %v667 = vmul.f32 %v656, %v665
    %v668 = vmul.f32 %v658, %v666
    %669 = vrot.lane.b32.xlu0 %v150, 56
    %v670 = vpop.permute.xlu0 %669
    %v673 = vsel %vm163, %v667, 0
    %675 = vmatprep.subr.mxu0 0.0
    %676 = vmatpush1.msra.mxu0 0.0
    %677 = vmatprep.subr.mxu0 0.0
    %678 = vmatpush1.msra.mxu0 0.0
    %679 = vmatprep.subr.mxu0 0.0
    %680 = vmatpush1.msra.mxu0 0.0
    %681 = vmatprep.subr.mxu0 0.0
    %682 = vmatpush1.msra.mxu0 0.0
    %683 = vmatprep.subr.mxu0 0.0
    %684 = vmatpush1.msra.mxu0 0.0
    %685 = vmatprep.subr.mxu0 0.0
    %686 = vmatpush1.msra.mxu0 0.0
    %687 = vmatprep.subr.mxu0 0.0
    %688 = vmatpush1.msra.mxu0 0.0
    %689 = vmatprep.subr.mxu0 0.0
    %690 = vmatpush1.msra.mxu0 0.0
    %691 = vmatprep.subr.mxu0 0.0
    %692 = vmatpush1.msra.mxu0 0.0
    %693 = vmatprep.subr.mxu0 0.0
    %694 = vmatpush1.msra.mxu0 0.0
    %695 = vmatprep.subr.mxu0 0.0
    %696 = vmatpush1.msra.mxu0 0.0
    %697 = vmatprep.subr.mxu0 0.0
    %698 = vmatpush1.msra.mxu0 0.0
    %699 = vmatprep.subr.mxu0 0.0
    %700 = vmatpush1.msra.mxu0 0.0
    %701 = vmatprep.subr.mxu0 0.0
    %702 = vmatpush1.msra.mxu0 0.0
    %703 = vmatprep.subr.mxu0 0.0
    %704 = vmatpush1.msra.mxu0 0.0
    %705 = vmatprep.subr.mxu0 0.0
    %706 = vmatpush1.msra.mxu0 %v670
    %707 = vmatprep.subr.mxu0 0.0
    %708 = vmatpush2.msra.mxu0 0.0
    %709 = vmatprep.subr.mxu0 0.0
    %710 = vmatpush2.msra.mxu0 0.0
    %711 = vmatprep.subr.mxu0 0.0
    %712 = vmatpush2.msra.mxu0 0.0
    %713 = vmatprep.subr.mxu0 0.0
    %714 = vmatpush2.msra.mxu0 0.0
    %715 = vmatprep.subr.mxu0 0.0
    %716 = vmatpush2.msra.mxu0 0.0
    %717 = vmatprep.subr.mxu0 0.0
    %718 = vmatpush2.msra.mxu0 0.0
    %719 = vmatprep.subr.mxu0 0.0
    %720 = vmatpush2.msra.mxu0 0.0
    %721 = vmatprep.subr.mxu0 0.0
    %722 = vmatpush2.msra.mxu0 0.0
    %723 = vmatprep.subr.mxu0 0.0
    %724 = vmatpush2.msra.mxu0 0.0
    %725 = vmatprep.subr.mxu0 0.0
    %726 = vmatpush2.msra.mxu0 0.0
    %727 = vmatprep.subr.mxu0 0.0
    %728 = vmatpush2.msra.mxu0 0.0
    %729 = vmatprep.subr.mxu0 0.0
    %730 = vmatpush2.msra.mxu0 0.0
    %731 = vmatprep.subr.mxu0 0.0
    %732 = vmatpush2.msra.mxu0 0.0
    %733 = vmatprep.subr.mxu0 0.0
    %734 = vmatpush2.msra.mxu0 0.0
    %735 = vmatprep.subr.mxu0 0.0
    %736 = vmatpush2.msra.mxu0 0.0
    %737 = vmatprep.subr.mxu0 0.0
    %738 = vmatpush2.msra.mxu0 0.0
    %739 = vmatprep.mubr.f32.mxu0 0.0
    %740 = vmatmul.mubr.f32.gmra.mxu0 %v673
    %v741 = vpop.f32.mrf.mxu0
    %v742 = vadd.f32 0.0, %v741
    %v743 = vpop.f32.mrf.mxu0
    %744 = vdwg.mxu0
    %745 = vrot.lane.b32.xlu0 %v155, 56
    %v746 = vpop.permute.xlu0 %745
    %v749 = vsel %vm163, %v668, 0
    %751 = vmatprep.subr.mxu0 0.0
    %752 = vmatpush1.msra.mxu0 0.0
    %753 = vmatprep.subr.mxu0 0.0
    %754 = vmatpush1.msra.mxu0 0.0
    %755 = vmatprep.subr.mxu0 0.0
    %756 = vmatpush1.msra.mxu0 0.0
    %757 = vmatprep.subr.mxu0 0.0
    %758 = vmatpush1.msra.mxu0 0.0
    %759 = vmatprep.subr.mxu0 0.0
    %760 = vmatpush1.msra.mxu0 0.0
    %761 = vmatprep.subr.mxu0 0.0
    %762 = vmatpush1.msra.mxu0 0.0
    %763 = vmatprep.subr.mxu0 0.0
    %764 = vmatpush1.msra.mxu0 0.0
    %765 = vmatprep.subr.mxu0 0.0
    %766 = vmatpush1.msra.mxu0 0.0
    %767 = vmatprep.subr.mxu0 0.0
    %768 = vmatpush1.msra.mxu0 0.0
    %769 = vmatprep.subr.mxu0 0.0
    %770 = vmatpush1.msra.mxu0 0.0
    %771 = vmatprep.subr.mxu0 0.0
    %772 = vmatpush1.msra.mxu0 0.0
    %773 = vmatprep.subr.mxu0 0.0
    %774 = vmatpush1.msra.mxu0 0.0
    %775 = vmatprep.subr.mxu0 0.0
    %776 = vmatpush1.msra.mxu0 0.0
    %777 = vmatprep.subr.mxu0 0.0
    %778 = vmatpush1.msra.mxu0 0.0
    %779 = vmatprep.subr.mxu0 0.0
    %780 = vmatpush1.msra.mxu0 0.0
    %781 = vmatprep.subr.mxu0 0.0
    %782 = vmatpush1.msra.mxu0 %v746
    %783 = vmatprep.subr.mxu0 0.0
    %784 = vmatpush2.msra.mxu0 0.0
    %785 = vmatprep.subr.mxu0 0.0
    %786 = vmatpush2.msra.mxu0 0.0
    %787 = vmatprep.subr.mxu0 0.0
    %788 = vmatpush2.msra.mxu0 0.0
    %789 = vmatprep.subr.mxu0 0.0
    %790 = vmatpush2.msra.mxu0 0.0
    %791 = vmatprep.subr.mxu0 0.0
    %792 = vmatpush2.msra.mxu0 0.0
    %793 = vmatprep.subr.mxu0 0.0
    %794 = vmatpush2.msra.mxu0 0.0
    %795 = vmatprep.subr.mxu0 0.0
    %796 = vmatpush2.msra.mxu0 0.0
    %797 = vmatprep.subr.mxu0 0.0
    %798 = vmatpush2.msra.mxu0 0.0
    %799 = vmatprep.subr.mxu0 0.0
    %800 = vmatpush2.msra.mxu0 0.0
    %801 = vmatprep.subr.mxu0 0.0
    %802 = vmatpush2.msra.mxu0 0.0
    %803 = vmatprep.subr.mxu0 0.0
    %804 = vmatpush2.msra.mxu0 0.0
    %805 = vmatprep.subr.mxu0 0.0
    %806 = vmatpush2.msra.mxu0 0.0
    %807 = vmatprep.subr.mxu0 0.0
    %808 = vmatpush2.msra.mxu0 0.0
    %809 = vmatprep.subr.mxu0 0.0
    %810 = vmatpush2.msra.mxu0 0.0
    %811 = vmatprep.subr.mxu0 0.0
    %812 = vmatpush2.msra.mxu0 0.0
    %813 = vmatprep.subr.mxu0 0.0
    %814 = vmatpush2.msra.mxu0 0.0
    %815 = vmatprep.mubr.f32.mxu0 0.0
    %816 = vmatmul.mubr.f32.gmra.mxu0 %v749
    %v817 = vpop.f32.mrf.mxu0
    %v818 = vadd.f32 0.0, %v817
    %v819 = vpop.f32.mrf.mxu0
    %820 = vdwg.mxu0
    %v822 = vsel %vm163, %v742, 0
    %v825 = vsel %vm163, %v818, 0
    %827 = vmatprep.subr.mxu0 0.0
    %828 = vmatpush1.msra.mxu0 0.0
    %829 = vmatprep.subr.mxu0 0.0
    %830 = vmatpush1.msra.mxu0 0.0
    %831 = vmatprep.subr.mxu0 0.0
    %832 = vmatpush1.msra.mxu0 0.0
    %833 = vmatprep.subr.mxu0 0.0
    %834 = vmatpush1.msra.mxu0 0.0
    %835 = vmatprep.subr.mxu0 0.0
    %836 = vmatpush1.msra.mxu0 0.0
    %837 = vmatprep.subr.mxu0 0.0
    %838 = vmatpush1.msra.mxu0 0.0
    %839 = vmatprep.subr.mxu0 0.0
    %840 = vmatpush1.msra.mxu0 0.0
    %841 = vmatprep.subr.mxu0 0.0
    %842 = vmatpush1.msra.mxu0 0.0
    %843 = vmatprep.subr.mxu0 0.0
    %844 = vmatpush1.msra.mxu0 0.0
    %845 = vmatprep.subr.mxu0 0.0
    %846 = vmatpush1.msra.mxu0 0.0
    %847 = vmatprep.subr.mxu0 0.0
    %848 = vmatpush1.msra.mxu0 0.0
    %849 = vmatprep.subr.mxu0 0.0
    %850 = vmatpush1.msra.mxu0 0.0
    %851 = vmatprep.subr.mxu0 0.0
    %852 = vmatpush1.msra.mxu0 0.0
    %853 = vmatprep.subr.mxu0 0.0
    %854 = vmatpush1.msra.mxu0 0.0
    %855 = vmatprep.subr.mxu0 0.0
    %856 = vmatpush1.msra.mxu0 0.0
    %857 = vmatprep.subr.mxu0 0.0
    %858 = vmatpush1.msra.mxu0 %v62
    %859 = vmatprep.subr.mxu0 0.0
    %860 = vmatpush2.msra.mxu0 0.0
    %861 = vmatprep.subr.mxu0 0.0
    %862 = vmatpush2.msra.mxu0 0.0
    %863 = vmatprep.subr.mxu0 0.0
    %864 = vmatpush2.msra.mxu0 0.0
    %865 = vmatprep.subr.mxu0 0.0
    %866 = vmatpush2.msra.mxu0 0.0
    %867 = vmatprep.subr.mxu0 0.0
    %868 = vmatpush2.msra.mxu0 0.0
    %869 = vmatprep.subr.mxu0 0.0
    %870 = vmatpush2.msra.mxu0 0.0
    %871 = vmatprep.subr.mxu0 0.0
    %872 = vmatpush2.msra.mxu0 0.0
    %873 = vmatprep.subr.mxu0 0.0
    %874 = vmatpush2.msra.mxu0 0.0
    %875 = vmatprep.subr.mxu0 0.0
    %876 = vmatpush2.msra.mxu0 0.0
    %877 = vmatprep.subr.mxu0 0.0
    %878 = vmatpush2.msra.mxu0 0.0
    %879 = vmatprep.subr.mxu0 0.0
    %880 = vmatpush2.msra.mxu0 0.0
    %881 = vmatprep.subr.mxu0 0.0
    %882 = vmatpush2.msra.mxu0 0.0
    %883 = vmatprep.subr.mxu0 0.0
    %884 = vmatpush2.msra.mxu0 0.0
    %885 = vmatprep.subr.mxu0 0.0
    %886 = vmatpush2.msra.mxu0 0.0
    %887 = vmatprep.subr.mxu0 0.0
    %888 = vmatpush2.msra.mxu0 0.0
    %889 = vmatprep.subr.mxu0 0.0
    %890 = vmatpush2.msra.mxu0 0.0
    %891 = vmatprep.mubr.f32.mxu0 0.0
    %892 = vmatmul.mubr.f32.gmra.mxu0 %v822
    %v893 = vpop.f32.mrf.mxu0
    %v894 = vadd.f32 0.0, %v893
    %v895 = vpop.f32.mrf.mxu0
    %896 = vmatprep.mubr.f32.mxu0 0.0
    %897 = vmatmul.mubr.f32.gmra.mxu0 %v825
    %v898 = vpop.f32.mrf.mxu0
    %v899 = vadd.f32 0.0, %v898
    %v900 = vpop.f32.mrf.mxu0
    %901 = vdwg.mxu0
    %v903 = vsel %vm163, %v412, 0
    %v906 = vsel %vm163, %v488, 0
    %908 = vmatprep.subr.mxu0 0.0
    %909 = vmatpush1.msra.mxu0 0.0
    %910 = vmatprep.subr.mxu0 0.0
    %911 = vmatpush1.msra.mxu0 0.0
    %912 = vmatprep.subr.mxu0 0.0
    %913 = vmatpush1.msra.mxu0 0.0
    %914 = vmatprep.subr.mxu0 0.0
    %915 = vmatpush1.msra.mxu0 0.0
    %916 = vmatprep.subr.mxu0 0.0
    %917 = vmatpush1.msra.mxu0 0.0
    %918 = vmatprep.subr.mxu0 0.0
    %919 = vmatpush1.msra.mxu0 0.0
    %920 = vmatprep.subr.mxu0 0.0
    %921 = vmatpush1.msra.mxu0 0.0
    %922 = vmatprep.subr.mxu0 0.0
    %923 = vmatpush1.msra.mxu0 0.0
    %924 = vmatprep.subr.mxu0 0.0
    %925 = vmatpush1.msra.mxu0 0.0
    %926 = vmatprep.subr.mxu0 0.0
    %927 = vmatpush1.msra.mxu0 0.0
    %928 = vmatprep.subr.mxu0 0.0
    %929 = vmatpush1.msra.mxu0 0.0
    %930 = vmatprep.subr.mxu0 0.0
    %931 = vmatpush1.msra.mxu0 0.0
    %932 = vmatprep.subr.mxu0 0.0
    %933 = vmatpush1.msra.mxu0 0.0
    %934 = vmatprep.subr.mxu0 0.0
    %935 = vmatpush1.msra.mxu0 0.0
    %936 = vmatprep.subr.mxu0 0.0
    %937 = vmatpush1.msra.mxu0 0.0
    %938 = vmatprep.subr.mxu0 0.0
    %939 = vmatpush1.msra.mxu0 %v61
    %940 = vmatprep.subr.mxu0 0.0
    %941 = vmatpush2.msra.mxu0 0.0
    %942 = vmatprep.subr.mxu0 0.0
    %943 = vmatpush2.msra.mxu0 0.0
    %944 = vmatprep.subr.mxu0 0.0
    %945 = vmatpush2.msra.mxu0 0.0
    %946 = vmatprep.subr.mxu0 0.0
    %947 = vmatpush2.msra.mxu0 0.0
    %948 = vmatprep.subr.mxu0 0.0
    %949 = vmatpush2.msra.mxu0 0.0
    %950 = vmatprep.subr.mxu0 0.0
    %951 = vmatpush2.msra.mxu0 0.0
    %952 = vmatprep.subr.mxu0 0.0
    %953 = vmatpush2.msra.mxu0 0.0
    %954 = vmatprep.subr.mxu0 0.0
    %955 = vmatpush2.msra.mxu0 0.0
    %956 = vmatprep.subr.mxu0 0.0
    %957 = vmatpush2.msra.mxu0 0.0
    %958 = vmatprep.subr.mxu0 0.0
    %959 = vmatpush2.msra.mxu0 0.0
    %960 = vmatprep.subr.mxu0 0.0
    %961 = vmatpush2.msra.mxu0 0.0
    %962 = vmatprep.subr.mxu0 0.0
    %963 = vmatpush2.msra.mxu0 0.0
    %964 = vmatprep.subr.mxu0 0.0
    %965 = vmatpush2.msra.mxu0 0.0
    %966 = vmatprep.subr.mxu0 0.0
    %967 = vmatpush2.msra.mxu0 0.0
    %968 = vmatprep.subr.mxu0 0.0
    %969 = vmatpush2.msra.mxu0 0.0
    %970 = vmatprep.subr.mxu0 0.0
    %971 = vmatpush2.msra.mxu0 0.0
    %972 = vmatprep.mubr.f32.mxu0 0.0
    %973 = vmatmul.mubr.f32.gmra.mxu0 %v903
    %v974 = vpop.f32.mrf.mxu0
    %v975 = vadd.f32 %v894, %v974
    %v976 = vpop.f32.mrf.mxu0
    %977 = vmatprep.mubr.f32.mxu0 0.0
    %978 = vmatmul.mubr.f32.gmra.mxu0 %v906
    %v979 = vpop.f32.mrf.mxu0
    %v980 = vadd.f32 %v899, %v979
    %v981 = vpop.f32.mrf.mxu0
    %982 = vdwg.mxu0
    %983 = vrot.lane.b32.xlu0 %v158, 112
    %v984 = vpop.permute.xlu0 %983
    %985 = vrot.lane.b32.xlu0 %v150, 80
    %v986 = vpop.permute.xlu0 %985
    %v987 = vsel %vm163, %v984, 0
    %v989 = vsel %vm163, %v986, 0
    %991 = vmatprep.subr.mxu0 0.0
    %992 = vmatpush1.xpose.msra.mxu0 0.0
    %993 = vmatprep.subr.mxu0 0.0
    %994 = vmatpush1.xpose.msra.mxu0 0.0
    %995 = vmatprep.subr.mxu0 0.0
    %996 = vmatpush1.xpose.msra.mxu0 0.0
    %997 = vmatprep.subr.mxu0 0.0
    %998 = vmatpush1.xpose.msra.mxu0 0.0
    %999 = vmatprep.subr.mxu0 0.0
    %1000 = vmatpush1.xpose.msra.mxu0 0.0
    %1001 = vmatprep.subr.mxu0 0.0
    %1002 = vmatpush1.xpose.msra.mxu0 0.0
    %1003 = vmatprep.subr.mxu0 0.0
    %1004 = vmatpush1.xpose.msra.mxu0 0.0
    %1005 = vmatprep.subr.mxu0 0.0
    %1006 = vmatpush1.xpose.msra.mxu0 0.0
    %1007 = vmatprep.subr.mxu0 0.0
    %1008 = vmatpush1.xpose.msra.mxu0 0.0
    %1009 = vmatprep.subr.mxu0 0.0
    %1010 = vmatpush1.xpose.msra.mxu0 0.0
    %1011 = vmatprep.subr.mxu0 0.0
    %1012 = vmatpush1.xpose.msra.mxu0 0.0
    %1013 = vmatprep.subr.mxu0 0.0
    %1014 = vmatpush1.xpose.msra.mxu0 0.0
    %1015 = vmatprep.subr.mxu0 0.0
    %1016 = vmatpush1.xpose.msra.mxu0 0.0
    %1017 = vmatprep.subr.mxu0 0.0
    %1018 = vmatpush1.xpose.msra.mxu0 0.0
    %1019 = vmatprep.subr.mxu0 0.0
    %1020 = vmatpush1.xpose.msra.mxu0 0.0
    %1021 = vmatprep.subr.mxu0 0.0
    %1022 = vmatpush1.xpose.msra.mxu0 %v989
    %1023 = vmatprep.subr.mxu0 0.0
    %1024 = vmatpush2.xpose.msra.mxu0 0.0
    %1025 = vmatprep.subr.mxu0 0.0
    %1026 = vmatpush2.xpose.msra.mxu0 0.0
    %1027 = vmatprep.subr.mxu0 0.0
    %1028 = vmatpush2.xpose.msra.mxu0 0.0
    %1029 = vmatprep.subr.mxu0 0.0
    %1030 = vmatpush2.xpose.msra.mxu0 0.0
    %1031 = vmatprep.subr.mxu0 0.0
    %1032 = vmatpush2.xpose.msra.mxu0 0.0
    %1033 = vmatprep.subr.mxu0 0.0
    %1034 = vmatpush2.xpose.msra.mxu0 0.0
    %1035 = vmatprep.subr.mxu0 0.0
    %1036 = vmatpush2.xpose.msra.mxu0 0.0
    %1037 = vmatprep.subr.mxu0 0.0
    %1038 = vmatpush2.xpose.msra.mxu0 0.0
    %1039 = vmatprep.subr.mxu0 0.0
    %1040 = vmatpush2.xpose.msra.mxu0 0.0
    %1041 = vmatprep.subr.mxu0 0.0
    %1042 = vmatpush2.xpose.msra.mxu0 0.0
    %1043 = vmatprep.subr.mxu0 0.0
    %1044 = vmatpush2.xpose.msra.mxu0 0.0
    %1045 = vmatprep.subr.mxu0 0.0
    %1046 = vmatpush2.xpose.msra.mxu0 0.0
    %1047 = vmatprep.subr.mxu0 0.0
    %1048 = vmatpush2.xpose.msra.mxu0 0.0
    %1049 = vmatprep.subr.mxu0 0.0
    %1050 = vmatpush2.xpose.msra.mxu0 0.0
    %1051 = vmatprep.subr.mxu0 0.0
    %1052 = vmatpush2.xpose.msra.mxu0 0.0
    %1053 = vmatprep.subr.mxu0 0.0
    %1054 = vmatpush2.xpose.msra.mxu0 0.0
    %1055 = vmatprep.mubr.f32.mxu0 0.0
    %1056 = vmatmul.mubr.f32.gmra.mxu0 %v987
    %v1057 = vpop.f32.mrf.mxu0
    %v1058 = vadd.f32 0.0, %v1057
    %v1059 = vpop.f32.mrf.mxu0
    %1060 = vdwg.mxu0
    %1061 = vrot.lane.b32.xlu0 %v159, 112
    %v1062 = vpop.permute.xlu0 %1061
    %1063 = vrot.lane.b32.xlu0 %v155, 80
    %v1064 = vpop.permute.xlu0 %1063
    %v1065 = vsel %vm163, %v1062, 0
    %v1067 = vsel %vm163, %v1064, 0
    %1069 = vmatprep.subr.mxu0 0.0
    %1070 = vmatpush1.xpose.msra.mxu0 0.0
    %1071 = vmatprep.subr.mxu0 0.0
    %1072 = vmatpush1.xpose.msra.mxu0 0.0
    %1073 = vmatprep.subr.mxu0 0.0
    %1074 = vmatpush1.xpose.msra.mxu0 0.0
    %1075 = vmatprep.subr.mxu0 0.0
    %1076 = vmatpush1.xpose.msra.mxu0 0.0
    %1077 = vmatprep.subr.mxu0 0.0
    %1078 = vmatpush1.xpose.msra.mxu0 0.0
    %1079 = vmatprep.subr.mxu0 0.0
    %1080 = vmatpush1.xpose.msra.mxu0 0.0
    %1081 = vmatprep.subr.mxu0 0.0
    %1082 = vmatpush1.xpose.msra.mxu0 0.0
    %1083 = vmatprep.subr.mxu0 0.0
    %1084 = vmatpush1.xpose.msra.mxu0 0.0
    %1085 = vmatprep.subr.mxu0 0.0
    %1086 = vmatpush1.xpose.msra.mxu0 0.0
    %1087 = vmatprep.subr.mxu0 0.0
    %1088 = vmatpush1.xpose.msra.mxu0 0.0
    %1089 = vmatprep.subr.mxu0 0.0
    %1090 = vmatpush1.xpose.msra.mxu0 0.0
    %1091 = vmatprep.subr.mxu0 0.0
    %1092 = vmatpush1.xpose.msra.mxu0 0.0
    %1093 = vmatprep.subr.mxu0 0.0
    %1094 = vmatpush1.xpose.msra.mxu0 0.0
    %1095 = vmatprep.subr.mxu0 0.0
    %1096 = vmatpush1.xpose.msra.mxu0 0.0
    %1097 = vmatprep.subr.mxu0 0.0
    %1098 = vmatpush1.xpose.msra.mxu0 0.0
    %1099 = vmatprep.subr.mxu0 0.0
    %1100 = vmatpush1.xpose.msra.mxu0 %v1067
    %1101 = vmatprep.subr.mxu0 0.0
    %1102 = vmatpush2.xpose.msra.mxu0 0.0
    %1103 = vmatprep.subr.mxu0 0.0
    %1104 = vmatpush2.xpose.msra.mxu0 0.0
    %1105 = vmatprep.subr.mxu0 0.0
    %1106 = vmatpush2.xpose.msra.mxu0 0.0
    %1107 = vmatprep.subr.mxu0 0.0
    %1108 = vmatpush2.xpose.msra.mxu0 0.0
    %1109 = vmatprep.subr.mxu0 0.0
    %1110 = vmatpush2.xpose.msra.mxu0 0.0
    %1111 = vmatprep.subr.mxu0 0.0
    %1112 = vmatpush2.xpose.msra.mxu0 0.0
    %1113 = vmatprep.subr.mxu0 0.0
    %1114 = vmatpush2.xpose.msra.mxu0 0.0
    %1115 = vmatprep.subr.mxu0 0.0
    %1116 = vmatpush2.xpose.msra.mxu0 0.0
    %1117 = vmatprep.subr.mxu0 0.0
    %1118 = vmatpush2.xpose.msra.mxu0 0.0
    %1119 = vmatprep.subr.mxu0 0.0
    %1120 = vmatpush2.xpose.msra.mxu0 0.0
    %1121 = vmatprep.subr.mxu0 0.0
    %1122 = vmatpush2.xpose.msra.mxu0 0.0
    %1123 = vmatprep.subr.mxu0 0.0
    %1124 = vmatpush2.xpose.msra.mxu0 0.0
    %1125 = vmatprep.subr.mxu0 0.0
    %1126 = vmatpush2.xpose.msra.mxu0 0.0
    %1127 = vmatprep.subr.mxu0 0.0
    %1128 = vmatpush2.xpose.msra.mxu0 0.0
    %1129 = vmatprep.subr.mxu0 0.0
    %1130 = vmatpush2.xpose.msra.mxu0 0.0
    %1131 = vmatprep.subr.mxu0 0.0
    %1132 = vmatpush2.xpose.msra.mxu0 0.0
    %1133 = vmatprep.mubr.f32.mxu0 0.0
    %1134 = vmatmul.mubr.f32.gmra.mxu0 %v1065
    %v1135 = vpop.f32.mrf.mxu0
    %v1136 = vadd.f32 0.0, %v1135
    %v1137 = vpop.f32.mrf.mxu0
    %1138 = vdwg.mxu0
    %v1139 = vsel %vm163, %v1058, -inf
    %1140 = vmax.xlane.f32.xlu0 %v1139
    %v1141 = vpop.xlane.xlu0 %1140
    %v1142 = vsel %vm163, %v1136, -inf
    %1143 = vmax.xlane.f32.xlu0 %v1142
    %v1144 = vpop.xlane.xlu0 %1143
    %v1145 = vsub.f32 %v1058, %v1141
    %v1146 = vsub.f32 %v1136, %v1144
    %v1147 = vmul.f32 %v1145, 1.442695
    %v1148 = vpow.pop %v1147
    %v1149 = vmul.f32 %v1146, 1.442695
    %v1150 = vpow.pop %v1149
    %v1151 = vsel %vm163, %v1148, 0.0
    %1152 = vadd.xlane.f32.xlu0 %v1151
    %v1153 = vpop.xlane.xlu0 %1152
    %v1154 = vsel %vm163, %v1150, 0.0
    %1155 = vadd.xlane.f32.xlu0 %v1154
    %v1156 = vpop.xlane.xlu0 %1155
    %v1157 = vrcp.pop %v1153
    %v1158 = vrcp.pop %v1156
    %v1159 = vmul.f32 %v1148, %v1157
    %v1160 = vmul.f32 %v1150, %v1158
    %1161 = vrot.lane.b32.xlu0 %v150, 48
    %v1162 = vpop.permute.xlu0 %1161
    %v1165 = vsel %vm163, %v1159, 0
    %1167 = vmatprep.subr.mxu0 0.0
    %1168 = vmatpush1.msra.mxu0 0.0
    %1169 = vmatprep.subr.mxu0 0.0
    %1170 = vmatpush1.msra.mxu0 0.0
    %1171 = vmatprep.subr.mxu0 0.0
    %1172 = vmatpush1.msra.mxu0 0.0
    %1173 = vmatprep.subr.mxu0 0.0
    %1174 = vmatpush1.msra.mxu0 0.0
    %1175 = vmatprep.subr.mxu0 0.0
    %1176 = vmatpush1.msra.mxu0 0.0
    %1177 = vmatprep.subr.mxu0 0.0
    %1178 = vmatpush1.msra.mxu0 0.0
    %1179 = vmatprep.subr.mxu0 0.0
    %1180 = vmatpush1.msra.mxu0 0.0
    %1181 = vmatprep.subr.mxu0 0.0
    %1182 = vmatpush1.msra.mxu0 0.0
    %1183 = vmatprep.subr.mxu0 0.0
    %1184 = vmatpush1.msra.mxu0 0.0
    %1185 = vmatprep.subr.mxu0 0.0
    %1186 = vmatpush1.msra.mxu0 0.0
    %1187 = vmatprep.subr.mxu0 0.0
    %1188 = vmatpush1.msra.mxu0 0.0
    %1189 = vmatprep.subr.mxu0 0.0
    %1190 = vmatpush1.msra.mxu0 0.0
    %1191 = vmatprep.subr.mxu0 0.0
    %1192 = vmatpush1.msra.mxu0 0.0
    %1193 = vmatprep.subr.mxu0 0.0
    %1194 = vmatpush1.msra.mxu0 0.0
    %1195 = vmatprep.subr.mxu0 0.0
    %1196 = vmatpush1.msra.mxu0 0.0
    %1197 = vmatprep.subr.mxu0 0.0
    %1198 = vmatpush1.msra.mxu0 %v1162
    %1199 = vmatprep.subr.mxu0 0.0
    %1200 = vmatpush2.msra.mxu0 0.0
    %1201 = vmatprep.subr.mxu0 0.0
    %1202 = vmatpush2.msra.mxu0 0.0
    %1203 = vmatprep.subr.mxu0 0.0
    %1204 = vmatpush2.msra.mxu0 0.0
    %1205 = vmatprep.subr.mxu0 0.0
    %1206 = vmatpush2.msra.mxu0 0.0
    %1207 = vmatprep.subr.mxu0 0.0
    %1208 = vmatpush2.msra.mxu0 0.0
    %1209 = vmatprep.subr.mxu0 0.0
    %1210 = vmatpush2.msra.mxu0 0.0
    %1211 = vmatprep.subr.mxu0 0.0
    %1212 = vmatpush2.msra.mxu0 0.0
    %1213 = vmatprep.subr.mxu0 0.0
    %1214 = vmatpush2.msra.mxu0 0.0
    %1215 = vmatprep.subr.mxu0 0.0
    %1216 = vmatpush2.msra.mxu0 0.0
    %1217 = vmatprep.subr.mxu0 0.0
    %1218 = vmatpush2.msra.mxu0 0.0
    %1219 = vmatprep.subr.mxu0 0.0
    %1220 = vmatpush2.msra.mxu0 0.0
    %1221 = vmatprep.subr.mxu0 0.0
    %1222 = vmatpush2.msra.mxu0 0.0
    %1223 = vmatprep.subr.mxu0 0.0
    %1224 = vmatpush2.msra.mxu0 0.0
    %1225 = vmatprep.subr.mxu0 0.0
    %1226 = vmatpush2.msra.mxu0 0.0
    %1227 = vmatprep.subr.mxu0 0.0
    %1228 = vmatpush2.msra.mxu0 0.0
    %1229 = vmatprep.subr.mxu0 0.0
    %1230 = vmatpush2.msra.mxu0 0.0
    %1231 = vmatprep.mubr.f32.mxu0 0.0
    %1232 = vmatmul.mubr.f32.gmra.mxu0 %v1165
    %v1233 = vpop.f32.mrf.mxu0
    %v1234 = vadd.f32 0.0, %v1233
    %v1235 = vpop.f32.mrf.mxu0
    %1236 = vdwg.mxu0
    %1237 = vrot.lane.b32.xlu0 %v155, 48
    %v1238 = vpop.permute.xlu0 %1237
    %v1241 = vsel %vm163, %v1160, 0
    %1243 = vmatprep.subr.mxu0 0.0
    %1244 = vmatpush1.msra.mxu0 0.0
    %1245 = vmatprep.subr.mxu0 0.0
    %1246 = vmatpush1.msra.mxu0 0.0
    %1247 = vmatprep.subr.mxu0 0.0
    %1248 = vmatpush1.msra.mxu0 0.0
    %1249 = vmatprep.subr.mxu0 0.0
    %1250 = vmatpush1.msra.mxu0 0.0
    %1251 = vmatprep.subr.mxu0 0.0
    %1252 = vmatpush1.msra.mxu0 0.0
    %1253 = vmatprep.subr.mxu0 0.0
    %1254 = vmatpush1.msra.mxu0 0.0
    %1255 = vmatprep.subr.mxu0 0.0
    %1256 = vmatpush1.msra.mxu0 0.0
    %1257 = vmatprep.subr.mxu0 0.0
    %1258 = vmatpush1.msra.mxu0 0.0
    %1259 = vmatprep.subr.mxu0 0.0
    %1260 = vmatpush1.msra.mxu0 0.0
    %1261 = vmatprep.subr.mxu0 0.0
    %1262 = vmatpush1.msra.mxu0 0.0
    %1263 = vmatprep.subr.mxu0 0.0
    %1264 = vmatpush1.msra.mxu0 0.0
    %1265 = vmatprep.subr.mxu0 0.0
    %1266 = vmatpush1.msra.mxu0 0.0
    %1267 = vmatprep.subr.mxu0 0.0
    %1268 = vmatpush1.msra.mxu0 0.0
    %1269 = vmatprep.subr.mxu0 0.0
    %1270 = vmatpush1.msra.mxu0 0.0
    %1271 = vmatprep.subr.mxu0 0.0
    %1272 = vmatpush1.msra.mxu0 0.0
    %1273 = vmatprep.subr.mxu0 0.0
    %1274 = vmatpush1.msra.mxu0 %v1238
    %1275 = vmatprep.subr.mxu0 0.0
    %1276 = vmatpush2.msra.mxu0 0.0
    %1277 = vmatprep.subr.mxu0 0.0
    %1278 = vmatpush2.msra.mxu0 0.0
    %1279 = vmatprep.subr.mxu0 0.0
    %1280 = vmatpush2.msra.mxu0 0.0
    %1281 = vmatprep.subr.mxu0 0.0
    %1282 = vmatpush2.msra.mxu0 0.0
    %1283 = vmatprep.subr.mxu0 0.0
    %1284 = vmatpush2.msra.mxu0 0.0
    %1285 = vmatprep.subr.mxu0 0.0
    %1286 = vmatpush2.msra.mxu0 0.0
    %1287 = vmatprep.subr.mxu0 0.0
    %1288 = vmatpush2.msra.mxu0 0.0
    %1289 = vmatprep.subr.mxu0 0.0
    %1290 = vmatpush2.msra.mxu0 0.0
    %1291 = vmatprep.subr.mxu0 0.0
    %1292 = vmatpush2.msra.mxu0 0.0
    %1293 = vmatprep.subr.mxu0 0.0
    %1294 = vmatpush2.msra.mxu0 0.0
    %1295 = vmatprep.subr.mxu0 0.0
    %1296 = vmatpush2.msra.mxu0 0.0
    %1297 = vmatprep.subr.mxu0 0.0
    %1298 = vmatpush2.msra.mxu0 0.0
    %1299 = vmatprep.subr.mxu0 0.0
    %1300 = vmatpush2.msra.mxu0 0.0
    %1301 = vmatprep.subr.mxu0 0.0
    %1302 = vmatpush2.msra.mxu0 0.0
    %1303 = vmatprep.subr.mxu0 0.0
    %1304 = vmatpush2.msra.mxu0 0.0
    %1305 = vmatprep.subr.mxu0 0.0
    %1306 = vmatpush2.msra.mxu0 0.0
    %1307 = vmatprep.mubr.f32.mxu0 0.0
    %1308 = vmatmul.mubr.f32.gmra.mxu0 %v1241
    %v1309 = vpop.f32.mrf.mxu0
    %v1310 = vadd.f32 0.0, %v1309
    %v1311 = vpop.f32.mrf.mxu0
    %1312 = vdwg.mxu0
    %v1314 = vsel %vm163, %v1234, 0
    %v1317 = vsel %vm163, %v1310, 0
    %1319 = vmatprep.subr.mxu0 0.0
    %1320 = vmatpush1.msra.mxu0 0.0
    %1321 = vmatprep.subr.mxu0 0.0
    %1322 = vmatpush1.msra.mxu0 0.0
    %1323 = vmatprep.subr.mxu0 0.0
    %1324 = vmatpush1.msra.mxu0 0.0
    %1325 = vmatprep.subr.mxu0 0.0
    %1326 = vmatpush1.msra.mxu0 0.0
    %1327 = vmatprep.subr.mxu0 0.0
    %1328 = vmatpush1.msra.mxu0 0.0
    %1329 = vmatprep.subr.mxu0 0.0
    %1330 = vmatpush1.msra.mxu0 0.0
    %1331 = vmatprep.subr.mxu0 0.0
    %1332 = vmatpush1.msra.mxu0 0.0
    %1333 = vmatprep.subr.mxu0 0.0
    %1334 = vmatpush1.msra.mxu0 0.0
    %1335 = vmatprep.subr.mxu0 0.0
    %1336 = vmatpush1.msra.mxu0 0.0
    %1337 = vmatprep.subr.mxu0 0.0
    %1338 = vmatpush1.msra.mxu0 0.0
    %1339 = vmatprep.subr.mxu0 0.0
    %1340 = vmatpush1.msra.mxu0 0.0
    %1341 = vmatprep.subr.mxu0 0.0
    %1342 = vmatpush1.msra.mxu0 0.0
    %1343 = vmatprep.subr.mxu0 0.0
    %1344 = vmatpush1.msra.mxu0 0.0
    %1345 = vmatprep.subr.mxu0 0.0
    %1346 = vmatpush1.msra.mxu0 0.0
    %1347 = vmatprep.subr.mxu0 0.0
    %1348 = vmatpush1.msra.mxu0 0.0
    %1349 = vmatprep.subr.mxu0 0.0
    %1350 = vmatpush1.msra.mxu0 %v63
    %1351 = vmatprep.subr.mxu0 0.0
    %1352 = vmatpush2.msra.mxu0 0.0
    %1353 = vmatprep.subr.mxu0 0.0
    %1354 = vmatpush2.msra.mxu0 0.0
    %1355 = vmatprep.subr.mxu0 0.0
    %1356 = vmatpush2.msra.mxu0 0.0
    %1357 = vmatprep.subr.mxu0 0.0
    %1358 = vmatpush2.msra.mxu0 0.0
    %1359 = vmatprep.subr.mxu0 0.0
    %1360 = vmatpush2.msra.mxu0 0.0
    %1361 = vmatprep.subr.mxu0 0.0
    %1362 = vmatpush2.msra.mxu0 0.0
    %1363 = vmatprep.subr.mxu0 0.0
    %1364 = vmatpush2.msra.mxu0 0.0
    %1365 = vmatprep.subr.mxu0 0.0
    %1366 = vmatpush2.msra.mxu0 0.0
    %1367 = vmatprep.subr.mxu0 0.0
    %1368 = vmatpush2.msra.mxu0 0.0
    %1369 = vmatprep.subr.mxu0 0.0
    %1370 = vmatpush2.msra.mxu0 0.0
    %1371 = vmatprep.subr.mxu0 0.0
    %1372 = vmatpush2.msra.mxu0 0.0
    %1373 = vmatprep.subr.mxu0 0.0
    %1374 = vmatpush2.msra.mxu0 0.0
    %1375 = vmatprep.subr.mxu0 0.0
    %1376 = vmatpush2.msra.mxu0 0.0
    %1377 = vmatprep.subr.mxu0 0.0
    %1378 = vmatpush2.msra.mxu0 0.0
    %1379 = vmatprep.subr.mxu0 0.0
    %1380 = vmatpush2.msra.mxu0 0.0
    %1381 = vmatprep.subr.mxu0 0.0
    %1382 = vmatpush2.msra.mxu0 0.0
    %1383 = vmatprep.mubr.f32.mxu0 0.0
    %1384 = vmatmul.mubr.f32.gmra.mxu0 %v1314
    %v1385 = vpop.f32.mrf.mxu0
    %v1386 = vadd.f32 0.0, %v1385
    %v1387 = vpop.f32.mrf.mxu0
    %1388 = vmatprep.mubr.f32.mxu0 0.0
    %1389 = vmatmul.mubr.f32.gmra.mxu0 %v1317
    %v1390 = vpop.f32.mrf.mxu0
    %v1391 = vadd.f32 0.0, %v1390
    %v1392 = vpop.f32.mrf.mxu0
    %1393 = vdwg.mxu0
    %v1394 = vadd.f32 %v975, %v1386
    %v1395 = vadd.f32 %v980, %v1391
    %1396 = vrot.lane.b32.xlu0 %v158, 104
    %v1397 = vpop.permute.xlu0 %1396
    %1398 = vrot.lane.b32.xlu0 %v150, 72
    %v1399 = vpop.permute.xlu0 %1398
    %v1400 = vsel %vm163, %v1397, 0
    %v1402 = vsel %vm163, %v1399, 0
    %1404 = vmatprep.subr.mxu0 0.0
    %1405 = vmatpush1.xpose.msra.mxu0 0.0
    %1406 = vmatprep.subr.mxu0 0.0
    %1407 = vmatpush1.xpose.msra.mxu0 0.0
    %1408 = vmatprep.subr.mxu0 0.0
    %1409 = vmatpush1.xpose.msra.mxu0 0.0
    %1410 = vmatprep.subr.mxu0 0.0
    %1411 = vmatpush1.xpose.msra.mxu0 0.0
    %1412 = vmatprep.subr.mxu0 0.0
    %1413 = vmatpush1.xpose.msra.mxu0 0.0
    %1414 = vmatprep.subr.mxu0 0.0
    %1415 = vmatpush1.xpose.msra.mxu0 0.0
    %1416 = vmatprep.subr.mxu0 0.0
    %1417 = vmatpush1.xpose.msra.mxu0 0.0
    %1418 = vmatprep.subr.mxu0 0.0
    %1419 = vmatpush1.xpose.msra.mxu0 0.0
    %1420 = vmatprep.subr.mxu0 0.0
    %1421 = vmatpush1.xpose.msra.mxu0 0.0
    %1422 = vmatprep.subr.mxu0 0.0
    %1423 = vmatpush1.xpose.msra.mxu0 0.0
    %1424 = vmatprep.subr.mxu0 0.0
    %1425 = vmatpush1.xpose.msra.mxu0 0.0
    %1426 = vmatprep.subr.mxu0 0.0
    %1427 = vmatpush1.xpose.msra.mxu0 0.0
    %1428 = vmatprep.subr.mxu0 0.0
    %1429 = vmatpush1.xpose.msra.mxu0 0.0
    %1430 = vmatprep.subr.mxu0 0.0
    %1431 = vmatpush1.xpose.msra.mxu0 0.0
    %1432 = vmatprep.subr.mxu0 0.0
    %1433 = vmatpush1.xpose.msra.mxu0 0.0
    %1434 = vmatprep.subr.mxu0 0.0
    %1435 = vmatpush1.xpose.msra.mxu0 %v1402
    %1436 = vmatprep.subr.mxu0 0.0
    %1437 = vmatpush2.xpose.msra.mxu0 0.0
    %1438 = vmatprep.subr.mxu0 0.0
    %1439 = vmatpush2.xpose.msra.mxu0 0.0
    %1440 = vmatprep.subr.mxu0 0.0
    %1441 = vmatpush2.xpose.msra.mxu0 0.0
    %1442 = vmatprep.subr.mxu0 0.0
    %1443 = vmatpush2.xpose.msra.mxu0 0.0
    %1444 = vmatprep.subr.mxu0 0.0
    %1445 = vmatpush2.xpose.msra.mxu0 0.0
    %1446 = vmatprep.subr.mxu0 0.0
    %1447 = vmatpush2.xpose.msra.mxu0 0.0
    %1448 = vmatprep.subr.mxu0 0.0
    %1449 = vmatpush2.xpose.msra.mxu0 0.0
    %1450 = vmatprep.subr.mxu0 0.0
    %1451 = vmatpush2.xpose.msra.mxu0 0.0
    %1452 = vmatprep.subr.mxu0 0.0
    %1453 = vmatpush2.xpose.msra.mxu0 0.0
    %1454 = vmatprep.subr.mxu0 0.0
    %1455 = vmatpush2.xpose.msra.mxu0 0.0
    %1456 = vmatprep.subr.mxu0 0.0
    %1457 = vmatpush2.xpose.msra.mxu0 0.0
    %1458 = vmatprep.subr.mxu0 0.0
    %1459 = vmatpush2.xpose.msra.mxu0 0.0
    %1460 = vmatprep.subr.mxu0 0.0
    %1461 = vmatpush2.xpose.msra.mxu0 0.0
    %1462 = vmatprep.subr.mxu0 0.0
    %1463 = vmatpush2.xpose.msra.mxu0 0.0
    %1464 = vmatprep.subr.mxu0 0.0
    %1465 = vmatpush2.xpose.msra.mxu0 0.0
    %1466 = vmatprep.subr.mxu0 0.0
    %1467 = vmatpush2.xpose.msra.mxu0 0.0
    %1468 = vmatprep.mubr.f32.mxu0 0.0
    %1469 = vmatmul.mubr.f32.gmra.mxu0 %v1400
    %v1470 = vpop.f32.mrf.mxu0
    %v1471 = vadd.f32 0.0, %v1470
    %v1472 = vpop.f32.mrf.mxu0
    %1473 = vdwg.mxu0
    %1474 = vrot.lane.b32.xlu0 %v159, 104
    %v1475 = vpop.permute.xlu0 %1474
    %1476 = vrot.lane.b32.xlu0 %v155, 72
    %v1477 = vpop.permute.xlu0 %1476
    %v1478 = vsel %vm163, %v1475, 0
    %v1480 = vsel %vm163, %v1477, 0
    %1482 = vmatprep.subr.mxu0 0.0
    %1483 = vmatpush1.xpose.msra.mxu0 0.0
    %1484 = vmatprep.subr.mxu0 0.0
    %1485 = vmatpush1.xpose.msra.mxu0 0.0
    %1486 = vmatprep.subr.mxu0 0.0
    %1487 = vmatpush1.xpose.msra.mxu0 0.0
    %1488 = vmatprep.subr.mxu0 0.0
    %1489 = vmatpush1.xpose.msra.mxu0 0.0
    %1490 = vmatprep.subr.mxu0 0.0
    %1491 = vmatpush1.xpose.msra.mxu0 0.0
    %1492 = vmatprep.subr.mxu0 0.0
    %1493 = vmatpush1.xpose.msra.mxu0 0.0
    %1494 = vmatprep.subr.mxu0 0.0
    %1495 = vmatpush1.xpose.msra.mxu0 0.0
    %1496 = vmatprep.subr.mxu0 0.0
    %1497 = vmatpush1.xpose.msra.mxu0 0.0
    %1498 = vmatprep.subr.mxu0 0.0
    %1499 = vmatpush1.xpose.msra.mxu0 0.0
    %1500 = vmatprep.subr.mxu0 0.0
    %1501 = vmatpush1.xpose.msra.mxu0 0.0
    %1502 = vmatprep.subr.mxu0 0.0
    %1503 = vmatpush1.xpose.msra.mxu0 0.0
    %1504 = vmatprep.subr.mxu0 0.0
    %1505 = vmatpush1.xpose.msra.mxu0 0.0
    %1506 = vmatprep.subr.mxu0 0.0
    %1507 = vmatpush1.xpose.msra.mxu0 0.0
    %1508 = vmatprep.subr.mxu0 0.0
    %1509 = vmatpush1.xpose.msra.mxu0 0.0
    %1510 = vmatprep.subr.mxu0 0.0
    %1511 = vmatpush1.xpose.msra.mxu0 0.0
    %1512 = vmatprep.subr.mxu0 0.0
    %1513 = vmatpush1.xpose.msra.mxu0 %v1480
    %1514 = vmatprep.subr.mxu0 0.0
    %1515 = vmatpush2.xpose.msra.mxu0 0.0
    %1516 = vmatprep.subr.mxu0 0.0
    %1517 = vmatpush2.xpose.msra.mxu0 0.0
    %1518 = vmatprep.subr.mxu0 0.0
    %1519 = vmatpush2.xpose.msra.mxu0 0.0
    %1520 = vmatprep.subr.mxu0 0.0
    %1521 = vmatpush2.xpose.msra.mxu0 0.0
    %1522 = vmatprep.subr.mxu0 0.0
    %1523 = vmatpush2.xpose.msra.mxu0 0.0
    %1524 = vmatprep.subr.mxu0 0.0
    %1525 = vmatpush2.xpose.msra.mxu0 0.0
    %1526 = vmatprep.subr.mxu0 0.0
    %1527 = vmatpush2.xpose.msra.mxu0 0.0
    %1528 = vmatprep.subr.mxu0 0.0
    %1529 = vmatpush2.xpose.msra.mxu0 0.0
    %1530 = vmatprep.subr.mxu0 0.0
    %1531 = vmatpush2.xpose.msra.mxu0 0.0
    %1532 = vmatprep.subr.mxu0 0.0
    %1533 = vmatpush2.xpose.msra.mxu0 0.0
    %1534 = vmatprep.subr.mxu0 0.0
    %1535 = vmatpush2.xpose.msra.mxu0 0.0
    %1536 = vmatprep.subr.mxu0 0.0
    %1537 = vmatpush2.xpose.msra.mxu0 0.0
    %1538 = vmatprep.subr.mxu0 0.0
    %1539 = vmatpush2.xpose.msra.mxu0 0.0
    %1540 = vmatprep.subr.mxu0 0.0
    %1541 = vmatpush2.xpose.msra.mxu0 0.0
    %1542 = vmatprep.subr.mxu0 0.0
    %1543 = vmatpush2.xpose.msra.mxu0 0.0
    %1544 = vmatprep.subr.mxu0 0.0
    %1545 = vmatpush2.xpose.msra.mxu0 0.0
    %1546 = vmatprep.mubr.f32.mxu0 0.0
    %1547 = vmatmul.mubr.f32.gmra.mxu0 %v1478
    %v1548 = vpop.f32.mrf.mxu0
    %v1549 = vadd.f32 0.0, %v1548
    %v1550 = vpop.f32.mrf.mxu0
    %1551 = vdwg.mxu0
    %v1552 = vsel %vm163, %v1471, -inf
    %1553 = vmax.xlane.f32.xlu0 %v1552
    %v1554 = vpop.xlane.xlu0 %1553
    %v1555 = vsel %vm163, %v1549, -inf
    %1556 = vmax.xlane.f32.xlu0 %v1555
    %v1557 = vpop.xlane.xlu0 %1556
    %v1558 = vsub.f32 %v1471, %v1554
    %v1559 = vsub.f32 %v1549, %v1557
    %v1560 = vmul.f32 %v1558, 1.442695
    %v1561 = vpow.pop %v1560
    %v1562 = vmul.f32 %v1559, 1.442695
    %v1563 = vpow.pop %v1562
    %v1564 = vsel %vm163, %v1561, 0.0
    %1565 = vadd.xlane.f32.xlu0 %v1564
    %v1566 = vpop.xlane.xlu0 %1565
    %v1567 = vsel %vm163, %v1563, 0.0
    %1568 = vadd.xlane.f32.xlu0 %v1567
    %v1569 = vpop.xlane.xlu0 %1568
    %v1570 = vrcp.pop %v1566
    %v1571 = vrcp.pop %v1569
    %v1572 = vmul.f32 %v1561, %v1570
    %v1573 = vmul.f32 %v1563, %v1571
    %1574 = vrot.lane.b32.xlu0 %v150, 40
    %v1575 = vpop.permute.xlu0 %1574
    %v1578 = vsel %vm163, %v1572, 0
    %1580 = vmatprep.subr.mxu0 0.0
    %1581 = vmatpush1.msra.mxu0 0.0
    %1582 = vmatprep.subr.mxu0 0.0
    %1583 = vmatpush1.msra.mxu0 0.0
    %1584 = vmatprep.subr.mxu0 0.0
    %1585 = vmatpush1.msra.mxu0 0.0
    %1586 = vmatprep.subr.mxu0 0.0
    %1587 = vmatpush1.msra.mxu0 0.0
    %1588 = vmatprep.subr.mxu0 0.0
    %1589 = vmatpush1.msra.mxu0 0.0
    %1590 = vmatprep.subr.mxu0 0.0
    %1591 = vmatpush1.msra.mxu0 0.0
    %1592 = vmatprep.subr.mxu0 0.0
    %1593 = vmatpush1.msra.mxu0 0.0
    %1594 = vmatprep.subr.mxu0 0.0
    %1595 = vmatpush1.msra.mxu0 0.0
    %1596 = vmatprep.subr.mxu0 0.0
    %1597 = vmatpush1.msra.mxu0 0.0
    %1598 = vmatprep.subr.mxu0 0.0
    %1599 = vmatpush1.msra.mxu0 0.0
    %1600 = vmatprep.subr.mxu0 0.0
    %1601 = vmatpush1.msra.mxu0 0.0
    %1602 = vmatprep.subr.mxu0 0.0
    %1603 = vmatpush1.msra.mxu0 0.0
    %1604 = vmatprep.subr.mxu0 0.0
    %1605 = vmatpush1.msra.mxu0 0.0
    %1606 = vmatprep.subr.mxu0 0.0
    %1607 = vmatpush1.msra.mxu0 0.0
    %1608 = vmatprep.subr.mxu0 0.0
    %1609 = vmatpush1.msra.mxu0 0.0
    %1610 = vmatprep.subr.mxu0 0.0
    %1611 = vmatpush1.msra.mxu0 %v1575
    %1612 = vmatprep.subr.mxu0 0.0
    %1613 = vmatpush2.msra.mxu0 0.0
    %1614 = vmatprep.subr.mxu0 0.0
    %1615 = vmatpush2.msra.mxu0 0.0
    %1616 = vmatprep.subr.mxu0 0.0
    %1617 = vmatpush2.msra.mxu0 0.0
    %1618 = vmatprep.subr.mxu0 0.0
    %1619 = vmatpush2.msra.mxu0 0.0
    %1620 = vmatprep.subr.mxu0 0.0
    %1621 = vmatpush2.msra.mxu0 0.0
    %1622 = vmatprep.subr.mxu0 0.0
    %1623 = vmatpush2.msra.mxu0 0.0
    %1624 = vmatprep.subr.mxu0 0.0
    %1625 = vmatpush2.msra.mxu0 0.0
    %1626 = vmatprep.subr.mxu0 0.0
    %1627 = vmatpush2.msra.mxu0 0.0
    %1628 = vmatprep.subr.mxu0 0.0
    %1629 = vmatpush2.msra.mxu0 0.0
    %1630 = vmatprep.subr.mxu0 0.0
    %1631 = vmatpush2.msra.mxu0 0.0
    %1632 = vmatprep.subr.mxu0 0.0
    %1633 = vmatpush2.msra.mxu0 0.0
    %1634 = vmatprep.subr.mxu0 0.0
    %1635 = vmatpush2.msra.mxu0 0.0
    %1636 = vmatprep.subr.mxu0 0.0
    %1637 = vmatpush2.msra.mxu0 0.0
    %1638 = vmatprep.subr.mxu0 0.0
    %1639 = vmatpush2.msra.mxu0 0.0
    %1640 = vmatprep.subr.mxu0 0.0
    %1641 = vmatpush2.msra.mxu0 0.0
    %1642 = vmatprep.subr.mxu0 0.0
    %1643 = vmatpush2.msra.mxu0 0.0
    %1644 = vmatprep.mubr.f32.mxu0 0.0
    %1645 = vmatmul.mubr.f32.gmra.mxu0 %v1578
    %v1646 = vpop.f32.mrf.mxu0
    %v1647 = vadd.f32 0.0, %v1646
    %v1648 = vpop.f32.mrf.mxu0
    %1649 = vdwg.mxu0
    %1650 = vrot.lane.b32.xlu0 %v155, 40
    %v1651 = vpop.permute.xlu0 %1650
    %v1654 = vsel %vm163, %v1573, 0
    %1656 = vmatprep.subr.mxu0 0.0
    %1657 = vmatpush1.msra.mxu0 0.0
    %1658 = vmatprep.subr.mxu0 0.0
    %1659 = vmatpush1.msra.mxu0 0.0
    %1660 = vmatprep.subr.mxu0 0.0
    %1661 = vmatpush1.msra.mxu0 0.0
    %1662 = vmatprep.subr.mxu0 0.0
    %1663 = vmatpush1.msra.mxu0 0.0
    %1664 = vmatprep.subr.mxu0 0.0
    %1665 = vmatpush1.msra.mxu0 0.0
    %1666 = vmatprep.subr.mxu0 0.0
    %1667 = vmatpush1.msra.mxu0 0.0
    %1668 = vmatprep.subr.mxu0 0.0
    %1669 = vmatpush1.msra.mxu0 0.0
    %1670 = vmatprep.subr.mxu0 0.0
    %1671 = vmatpush1.msra.mxu0 0.0
    %1672 = vmatprep.subr.mxu0 0.0
    %1673 = vmatpush1.msra.mxu0 0.0
    %1674 = vmatprep.subr.mxu0 0.0
    %1675 = vmatpush1.msra.mxu0 0.0
    %1676 = vmatprep.subr.mxu0 0.0
    %1677 = vmatpush1.msra.mxu0 0.0
    %1678 = vmatprep.subr.mxu0 0.0
    %1679 = vmatpush1.msra.mxu0 0.0
    %1680 = vmatprep.subr.mxu0 0.0
    %1681 = vmatpush1.msra.mxu0 0.0
    %1682 = vmatprep.subr.mxu0 0.0
    %1683 = vmatpush1.msra.mxu0 0.0
    %1684 = vmatprep.subr.mxu0 0.0
    %1685 = vmatpush1.msra.mxu0 0.0
    %1686 = vmatprep.subr.mxu0 0.0
    %1687 = vmatpush1.msra.mxu0 %v1651
    %1688 = vmatprep.subr.mxu0 0.0
    %1689 = vmatpush2.msra.mxu0 0.0
    %1690 = vmatprep.subr.mxu0 0.0
    %1691 = vmatpush2.msra.mxu0 0.0
    %1692 = vmatprep.subr.mxu0 0.0
    %1693 = vmatpush2.msra.mxu0 0.0
    %1694 = vmatprep.subr.mxu0 0.0
    %1695 = vmatpush2.msra.mxu0 0.0
    %1696 = vmatprep.subr.mxu0 0.0
    %1697 = vmatpush2.msra.mxu0 0.0
    %1698 = vmatprep.subr.mxu0 0.0
    %1699 = vmatpush2.msra.mxu0 0.0
    %1700 = vmatprep.subr.mxu0 0.0
    %1701 = vmatpush2.msra.mxu0 0.0
    %1702 = vmatprep.subr.mxu0 0.0
    %1703 = vmatpush2.msra.mxu0 0.0
    %1704 = vmatprep.subr.mxu0 0.0
    %1705 = vmatpush2.msra.mxu0 0.0
    %1706 = vmatprep.subr.mxu0 0.0
    %1707 = vmatpush2.msra.mxu0 0.0
    %1708 = vmatprep.subr.mxu0 0.0
    %1709 = vmatpush2.msra.mxu0 0.0
    %1710 = vmatprep.subr.mxu0 0.0
    %1711 = vmatpush2.msra.mxu0 0.0
    %1712 = vmatprep.subr.mxu0 0.0
    %1713 = vmatpush2.msra.mxu0 0.0
    %1714 = vmatprep.subr.mxu0 0.0
    %1715 = vmatpush2.msra.mxu0 0.0
    %1716 = vmatprep.subr.mxu0 0.0
    %1717 = vmatpush2.msra.mxu0 0.0
    %1718 = vmatprep.subr.mxu0 0.0
    %1719 = vmatpush2.msra.mxu0 0.0
    %1720 = vmatprep.mubr.f32.mxu0 0.0
    %1721 = vmatmul.mubr.f32.gmra.mxu0 %v1654
    %v1722 = vpop.f32.mrf.mxu0
    %v1723 = vadd.f32 0.0, %v1722
    %v1724 = vpop.f32.mrf.mxu0
    %1725 = vdwg.mxu0
    %v1727 = vsel %vm163, %v1647, 0
    %v1730 = vsel %vm163, %v1723, 0
    %1732 = vmatprep.subr.mxu0 0.0
    %1733 = vmatpush1.msra.mxu0 0.0
    %1734 = vmatprep.subr.mxu0 0.0
    %1735 = vmatpush1.msra.mxu0 0.0
    %1736 = vmatprep.subr.mxu0 0.0
    %1737 = vmatpush1.msra.mxu0 0.0
    %1738 = vmatprep.subr.mxu0 0.0
    %1739 = vmatpush1.msra.mxu0 0.0
    %1740 = vmatprep.subr.mxu0 0.0
    %1741 = vmatpush1.msra.mxu0 0.0
    %1742 = vmatprep.subr.mxu0 0.0
    %1743 = vmatpush1.msra.mxu0 0.0
    %1744 = vmatprep.subr.mxu0 0.0
    %1745 = vmatpush1.msra.mxu0 0.0
    %1746 = vmatprep.subr.mxu0 0.0
    %1747 = vmatpush1.msra.mxu0 0.0
    %1748 = vmatprep.subr.mxu0 0.0
    %1749 = vmatpush1.msra.mxu0 0.0
    %1750 = vmatprep.subr.mxu0 0.0
    %1751 = vmatpush1.msra.mxu0 0.0
    %1752 = vmatprep.subr.mxu0 0.0
    %1753 = vmatpush1.msra.mxu0 0.0
    %1754 = vmatprep.subr.mxu0 0.0
    %1755 = vmatpush1.msra.mxu0 0.0
    %1756 = vmatprep.subr.mxu0 0.0
    %1757 = vmatpush1.msra.mxu0 0.0
    %1758 = vmatprep.subr.mxu0 0.0
    %1759 = vmatpush1.msra.mxu0 0.0
    %1760 = vmatprep.subr.mxu0 0.0
    %1761 = vmatpush1.msra.mxu0 0.0
    %1762 = vmatprep.subr.mxu0 0.0
    %1763 = vmatpush1.msra.mxu0 %v64
    %1764 = vmatprep.subr.mxu0 0.0
    %1765 = vmatpush2.msra.mxu0 0.0
    %1766 = vmatprep.subr.mxu0 0.0
    %1767 = vmatpush2.msra.mxu0 0.0
    %1768 = vmatprep.subr.mxu0 0.0
    %1769 = vmatpush2.msra.mxu0 0.0
    %1770 = vmatprep.subr.mxu0 0.0
    %1771 = vmatpush2.msra.mxu0 0.0
    %1772 = vmatprep.subr.mxu0 0.0
    %1773 = vmatpush2.msra.mxu0 0.0
    %1774 = vmatprep.subr.mxu0 0.0
    %1775 = vmatpush2.msra.mxu0 0.0
    %1776 = vmatprep.subr.mxu0 0.0
    %1777 = vmatpush2.msra.mxu0 0.0
    %1778 = vmatprep.subr.mxu0 0.0
    %1779 = vmatpush2.msra.mxu0 0.0
    %1780 = vmatprep.subr.mxu0 0.0
    %1781 = vmatpush2.msra.mxu0 0.0
    %1782 = vmatprep.subr.mxu0 0.0
    %1783 = vmatpush2.msra.mxu0 0.0
    %1784 = vmatprep.subr.mxu0 0.0
    %1785 = vmatpush2.msra.mxu0 0.0
    %1786 = vmatprep.subr.mxu0 0.0
    %1787 = vmatpush2.msra.mxu0 0.0
    %1788 = vmatprep.subr.mxu0 0.0
    %1789 = vmatpush2.msra.mxu0 0.0
    %1790 = vmatprep.subr.mxu0 0.0
    %1791 = vmatpush2.msra.mxu0 0.0
    %1792 = vmatprep.subr.mxu0 0.0
    %1793 = vmatpush2.msra.mxu0 0.0
    %1794 = vmatprep.subr.mxu0 0.0
    %1795 = vmatpush2.msra.mxu0 0.0
    %1796 = vmatprep.mubr.f32.mxu0 0.0
    %1797 = vmatmul.mubr.f32.gmra.mxu0 %v1727
    %v1798 = vpop.f32.mrf.mxu0
    %v1799 = vadd.f32 0.0, %v1798
    %v1800 = vpop.f32.mrf.mxu0
    %1801 = vmatprep.mubr.f32.mxu0 0.0
    %1802 = vmatmul.mubr.f32.gmra.mxu0 %v1730
    %v1803 = vpop.f32.mrf.mxu0
    %v1804 = vadd.f32 0.0, %v1803
    %v1805 = vpop.f32.mrf.mxu0
    %1806 = vdwg.mxu0
    %v1807 = vadd.f32 %v1394, %v1799
    %v1808 = vadd.f32 %v1395, %v1804
    %v1809 = vld [vmem:[%s4] sm:$0x1]
    %v1811 = vlaneseq
    %v1812 = vshrl.u32 %v1811, 7
    %v1813 = vsub.s32 0, %v1812
    %v1814 = vrot.slane %v1809, %v1813
    %v1816 = vadd.f32 %v1807, %v1814
    %v1817 = vadd.f32 %v1808, %v1814
    %v1818 = vadd.f32 %v59, %v1816
    %v1819 = vadd.f32 %v60, %v1817
    %v1820 = vld [vmem:[%s9] sm:$0x1]
    %v1821 = vld [vmem:[%s10] sm:$0x1]
    %v1822 = vsel %vm76, %v1818, 0.0
    %1823 = vadd.xlane.f32.xlu0 %v1822
    %v1824 = vpop.xlane.xlu0 %1823
    %v1825 = vsel %vm76, %v1819, 0.0
    %1826 = vadd.xlane.f32.xlu0 %v1825
    %v1827 = vpop.xlane.xlu0 %1826
    %v1828 = vrcp.pop 32.0
    %v1829 = vmul.f32 %v1824, %v1828
    %v1830 = vmul.f32 %v1827, %v1828
    %v1831 = vsub.f32 %v1818, %v1829
    %v1832 = vsub.f32 %v1819, %v1830
    %v1833 = vmul.f32 %v1831, %v1831
    %v1834 = vmul.f32 %v1832, %v1832
    %v1835 = vsel %vm76, %v1833, 0.0
    %1836 = vadd.xlane.f32.xlu0 %v1835
    %v1837 = vpop.xlane.xlu0 %1836
    %v1838 = vsel %vm76, %v1834, 0.0
    %1839 = vadd.xlane.f32.xlu0 %v1838
    %v1840 = vpop.xlane.xlu0 %1839
    %v1841 = vmul.f32 %v1837, %v1828
    %v1842 = vmul.f32 %v1840, %v1828
    %v1843 = vadd.f32 %v1841, 1e-05
    %v1844 = vadd.f32 %v1842, 1e-05
    %v1845 = vrsqrt.pop %v1843
    %v1846 = vrsqrt.pop %v1844
    %v1847 = vmul.f32 %v1831, %v1845
    %v1848 = vmul.f32 %v1832, %v1846
    %v1850 = vlaneseq
    %v1851 = vshrl.u32 %v1850, 7
    %v1852 = vsub.s32 0, %v1851
    %v1853 = vrot.slane %v1820, %v1852
    %v1855 = vmul.f32 %v1847, %v1853
    %v1856 = vmul.f32 %v1848, %v1853
    %v1858 = vlaneseq
    %v1859 = vshrl.u32 %v1858, 7
    %v1860 = vsub.s32 0, %v1859
    %v1861 = vrot.slane %v1821, %v1860
    %v1863 = vadd.f32 %v1855, %v1861
    %v1864 = vadd.f32 %v1856, %v1861
    %v1865 = vld [vmem:[%s5] sm:$0xff]
    %v1866 = vld [vmem:[%s5 + $0x8] sm:$0xff]
    %v1867 = vld [vmem:[%s5 + $0x10] sm:$0xff]
    %v1868 = vld [vmem:[%s5 + $0x18] sm:$0xff]
    %v1869 = vld [vmem:[%s6] sm:$0x1]
    %v1871 = vlaneseq
    %v1872 = vshrl.u32 %v1871, 7
    %v1873 = vsub.s32 0, %v1872
    %v1874 = vrot.slane %v1869, %v1873
    %v1877 = vsel %vm76, %v1863, 0
    %v1880 = vsel %vm76, %v1864, 0
    %1882 = vmatprep.subr.mxu0 0.0
    %1883 = vmatpush1.msra.mxu0 0.0
    %1884 = vmatprep.subr.mxu0 0.0
    %1885 = vmatpush1.msra.mxu0 0.0
    %1886 = vmatprep.subr.mxu0 0.0
    %1887 = vmatpush1.msra.mxu0 0.0
    %1888 = vmatprep.subr.mxu0 0.0
    %1889 = vmatpush1.msra.mxu0 0.0
    %1890 = vmatprep.subr.mxu0 0.0
    %1891 = vmatpush1.msra.mxu0 0.0
    %1892 = vmatprep.subr.mxu0 0.0
    %1893 = vmatpush1.msra.mxu0 0.0
    %1894 = vmatprep.subr.mxu0 0.0
    %1895 = vmatpush1.msra.mxu0 0.0
    %1896 = vmatprep.subr.mxu0 0.0
    %1897 = vmatpush1.msra.mxu0 0.0
    %1898 = vmatprep.subr.mxu0 0.0
    %1899 = vmatpush1.msra.mxu0 0.0
    %1900 = vmatprep.subr.mxu0 0.0
    %1901 = vmatpush1.msra.mxu0 0.0
    %1902 = vmatprep.subr.mxu0 0.0
    %1903 = vmatpush1.msra.mxu0 0.0
    %1904 = vmatprep.subr.mxu0 0.0
    %1905 = vmatpush1.msra.mxu0 0.0
    %1906 = vmatprep.subr.mxu0 0.0
    %1907 = vmatpush1.msra.mxu0 %v1868
    %1908 = vmatprep.subr.mxu0 0.0
    %1909 = vmatpush1.msra.mxu0 %v1867
    %1910 = vmatprep.subr.mxu0 0.0
    %1911 = vmatpush1.msra.mxu0 %v1866
    %1912 = vmatprep.subr.mxu0 0.0
    %1913 = vmatpush1.msra.mxu0 %v1865
    %1914 = vmatprep.subr.mxu0 0.0
    %1915 = vmatpush2.msra.mxu0 0.0
    %1916 = vmatprep.subr.mxu0 0.0
    %1917 = vmatpush2.msra.mxu0 0.0
    %1918 = vmatprep.subr.mxu0 0.0
    %1919 = vmatpush2.msra.mxu0 0.0
    %1920 = vmatprep.subr.mxu0 0.0
    %1921 = vmatpush2.msra.mxu0 0.0
    %1922 = vmatprep.subr.mxu0 0.0
    %1923 = vmatpush2.msra.mxu0 0.0
    %1924 = vmatprep.subr.mxu0 0.0
    %1925 = vmatpush2.msra.mxu0 0.0
    %1926 = vmatprep.subr.mxu0 0.0
    %1927 = vmatpush2.msra.mxu0 0.0
    %1928 = vmatprep.subr.mxu0 0.0
    %1929 = vmatpush2.msra.mxu0 0.0
    %1930 = vmatprep.subr.mxu0 0.0
    %1931 = vmatpush2.msra.mxu0 0.0
    %1932 = vmatprep.subr.mxu0 0.0
    %1933 = vmatpush2.msra.mxu0 0.0
    %1934 = vmatprep.subr.mxu0 0.0
    %1935 = vmatpush2.msra.mxu0 0.0
    %1936 = vmatprep.subr.mxu0 0.0
    %1937 = vmatpush2.msra.mxu0 0.0
    %1938 = vmatprep.subr.mxu0 0.0
    %1939 = vmatpush2.msra.mxu0 0.0
    %1940 = vmatprep.subr.mxu0 0.0
    %1941 = vmatpush2.msra.mxu0 0.0
    %1942 = vmatprep.subr.mxu0 0.0
    %1943 = vmatpush2.msra.mxu0 0.0
    %1944 = vmatprep.subr.mxu0 0.0
    %1945 = vmatpush2.msra.mxu0 0.0
    %1946 = vmatprep.mubr.f32.mxu0 0.0
    %1947 = vmatmul.mubr.f32.gmra.mxu0 %v1877
    %v1948 = vpop.f32.mrf.mxu0
    %v1949 = vadd.f32 %v1874, %v1948
    %v1950 = vpop.f32.mrf.mxu0
    %1951 = vmatprep.mubr.f32.mxu0 0.0
    %1952 = vmatmul.mubr.f32.gmra.mxu0 %v1880
    %v1953 = vpop.f32.mrf.mxu0
    %v1954 = vadd.f32 %v1874, %v1953
    %v1955 = vpop.f32.mrf.mxu0
    %1956 = vdwg.mxu0
    %v1957 = vmax.f32 %v1949, 0.0
    %v1958 = vmax.f32 %v1954, 0.0
    %v1959 = vld [vmem:[%s7] sm:$0xff]
    %v1960 = vld [vmem:[%s7 + $0x8] sm:$0xff]
    %v1961 = vld [vmem:[%s7 + $0x10] sm:$0xff]
    %v1962 = vld [vmem:[%s7 + $0x18] sm:$0xff]
    %v1963 = vld [vmem:[%s7 + $0x20] sm:$0xff]
    %v1964 = vld [vmem:[%s7 + $0x28] sm:$0xff]
    %v1965 = vld [vmem:[%s7 + $0x30] sm:$0xff]
    %v1966 = vld [vmem:[%s7 + $0x38] sm:$0xff]
    %v1967 = vld [vmem:[%s8] sm:$0x1]
    %v1969 = vlaneseq
    %v1970 = vshrl.u32 %v1969, 7
    %v1971 = vsub.s32 0, %v1970
    %v1972 = vrot.slane %v1967, %v1971
    %vm1974 = vcmask 523264
    %v1976 = vsel %vm1974, %v1957, 0
    %v1979 = vsel %vm1974, %v1958, 0
    %1981 = vmatprep.subr.mxu0 0.0
    %1982 = vmatpush1.msra.mxu0 0.0
    %1983 = vmatprep.subr.mxu0 0.0
    %1984 = vmatpush1.msra.mxu0 0.0
    %1985 = vmatprep.subr.mxu0 0.0
    %1986 = vmatpush1.msra.mxu0 0.0
    %1987 = vmatprep.subr.mxu0 0.0
    %1988 = vmatpush1.msra.mxu0 0.0
    %1989 = vmatprep.subr.mxu0 0.0
    %1990 = vmatpush1.msra.mxu0 0.0
    %1991 = vmatprep.subr.mxu0 0.0
    %1992 = vmatpush1.msra.mxu0 0.0
    %1993 = vmatprep.subr.mxu0 0.0
    %1994 = vmatpush1.msra.mxu0 0.0
    %1995 = vmatprep.subr.mxu0 0.0
    %1996 = vmatpush1.msra.mxu0 0.0
    %1997 = vmatprep.subr.mxu0 0.0
    %1998 = vmatpush1.msra.mxu0 %v1966
    %1999 = vmatprep.subr.mxu0 0.0
    %2000 = vmatpush1.msra.mxu0 %v1965
    %2001 = vmatprep.subr.mxu0 0.0
    %2002 = vmatpush1.msra.mxu0 %v1964
    %2003 = vmatprep.subr.mxu0 0.0
    %2004 = vmatpush1.msra.mxu0 %v1963
    %2005 = vmatprep.subr.mxu0 0.0
    %2006 = vmatpush1.msra.mxu0 %v1962
    %2007 = vmatprep.subr.mxu0 0.0
    %2008 = vmatpush1.msra.mxu0 %v1961
    %2009 = vmatprep.subr.mxu0 0.0
    %2010 = vmatpush1.msra.mxu0 %v1960
    %2011 = vmatprep.subr.mxu0 0.0
    %2012 = vmatpush1.msra.mxu0 %v1959
    %2013 = vmatprep.subr.mxu0 0.0
    %2014 = vmatpush2.msra.mxu0 0.0
    %2015 = vmatprep.subr.mxu0 0.0
    %2016 = vmatpush2.msra.mxu0 0.0
    %2017 = vmatprep.subr.mxu0 0.0
    %2018 = vmatpush2.msra.mxu0 0.0
    %2019 = vmatprep.subr.mxu0 0.0
    %2020 = vmatpush2.msra.mxu0 0.0
    %2021 = vmatprep.subr.mxu0 0.0
    %2022 = vmatpush2.msra.mxu0 0.0
    %2023 = vmatprep.subr.mxu0 0.0
    %2024 = vmatpush2.msra.mxu0 0.0
    %2025 = vmatprep.subr.mxu0 0.0
    %2026 = vmatpush2.msra.mxu0 0.0
    %2027 = vmatprep.subr.mxu0 0.0
    %2028 = vmatpush2.msra.mxu0 0.0
    %2029 = vmatprep.subr.mxu0 0.0
    %2030 = vmatpush2.msra.mxu0 0.0
    %2031 = vmatprep.subr.mxu0 0.0
    %2032 = vmatpush2.msra.mxu0 0.0
    %2033 = vmatprep.subr.mxu0 0.0
    %2034 = vmatpush2.msra.mxu0 0.0
    %2035 = vmatprep.subr.mxu0 0.0
    %2036 = vmatpush2.msra.mxu0 0.0
    %2037 = vmatprep.subr.mxu0 0.0
    %2038 = vmatpush2.msra.mxu0 0.0
    %2039 = vmatprep.subr.mxu0 0.0
    %2040 = vmatpush2.msra.mxu0 0.0
    %2041 = vmatprep.subr.mxu0 0.0
    %2042 = vmatpush2.msra.mxu0 0.0
    %2043 = vmatprep.subr.mxu0 0.0
    %2044 = vmatpush2.msra.mxu0 0.0
    %2045 = vmatprep.mubr.f32.mxu0 0.0
    %2046 = vmatmul.mubr.f32.gmra.mxu0 %v1976
    %v2047 = vpop.f32.mrf.mxu0
    %v2048 = vadd.f32 %v1972, %v2047
    %v2049 = vpop.f32.mrf.mxu0
    %2050 = vmatprep.mubr.f32.mxu0 0.0
    %2051 = vmatmul.mubr.f32.gmra.mxu0 %v1979
    %v2052 = vpop.f32.mrf.mxu0
    %v2053 = vadd.f32 %v1972, %v2052
    %v2054 = vpop.f32.mrf.mxu0
    %2055 = vdwg.mxu0
    %v2056 = vadd.f32 %v1863, %v2048
    %v2057 = vadd.f32 %v1864, %v2053
    %v2058 = vld [vmem:[%s11] sm:$0x1]
    %v2059 = vld [vmem:[%s12] sm:$0x1]
    %v2060 = vsel %vm76, %v2056, 0.0
    %2061 = vadd.xlane.f32.xlu0 %v2060
    %v2062 = vpop.xlane.xlu0 %2061
    %v2063 = vsel %vm76, %v2057, 0.0
    %2064 = vadd.xlane.f32.xlu0 %v2063
    %v2065 = vpop.xlane.xlu0 %2064
    %v2066 = vmul.f32 %v2062, %v1828
    %v2067 = vmul.f32 %v2065, %v1828
    %v2068 = vsub.f32 %v2056, %v2066
    %v2069 = vsub.f32 %v2057, %v2067
    %v2070 = vmul.f32 %v2068, %v2068
    %v2071 = vmul.f32 %v2069, %v2069
    %v2072 = vsel %vm76, %v2070, 0.0
    %2073 = vadd.xlane.f32.xlu0 %v2072
    %v2074 = vpop.xlane.xlu0 %2073
    %v2075 = vsel %vm76, %v2071, 0.0
    %2076 = vadd.xlane.f32.xlu0 %v2075
    %v2077 = vpop.xlane.xlu0 %2076
    %v2078 = vmul.f32 %v2074, %v1828
    %v2079 = vmul.f32 %v2077, %v1828
    %v2080 = vadd.f32 %v2078, 1e-05
    %v2081 = vadd.f32 %v2079, 1e-05
    %v2082 = vrsqrt.pop %v2080
    %v2083 = vrsqrt.pop %v2081
    %v2084 = vmul.f32 %v2068, %v2082
    %v2085 = vmul.f32 %v2069, %v2083
    %v2087 = vlaneseq
    %v2088 = vshrl.u32 %v2087, 7
    %v2089 = vsub.s32 0, %v2088
    %v2090 = vrot.slane %v2058, %v2089
    %v2092 = vmul.f32 %v2084, %v2090
    %v2093 = vmul.f32 %v2085, %v2090
    %v2095 = vlaneseq
    %v2096 = vshrl.u32 %v2095, 7
    %v2097 = vsub.s32 0, %v2096
    %v2098 = vrot.slane %v2059, %v2097
    %v2100 = vadd.f32 %v2092, %v2098
    %v2101 = vadd.f32 %v2093, %v2098
    %2102 = vst.msk [vmem:[#allocation5] sm:$0xff] %vm76, %v2100
    %2103 = vst.msk [vmem:[#allocation5 + $0x8] sm:$0xff] %vm76, %v2101
    // Predicated region
    $region58: #{tpu_custom_call.1} parent=1 // pred_check
      _
    $region59: #{tpu_custom_call.1} parent=1 // pred_check_branch
      %2105 = sbr.rel (0) target = $region61
    $region60: #{tpu_custom_call.1} parent=1 // pred_region
      %s2107 = ssub.s32 256, 256
      %2108 = vsyncadd [#allocation4], %s2107
      %s2109 = sshll.u32 [#allocation5], 4
      %s2110 = int_to_ptr.vmem [resolvable:$true] %s2109
      %2115 = dma.vmem_to_hbm [thread:$0]  %s2110, 256, %s13, [#allocation4], 128, 128, 8
    $region61: #{tpu_custom_call.1} parent=1 // pred_fallthru
      _
    // Predicated region
    $region62: #{tpu_custom_call.1} parent=1 // pred_check
      _
    $region63: #{tpu_custom_call.1} parent=1 // pred_check_branch
      %2117 = sbr.rel (0) target = $region65
    $region64: #{tpu_custom_call.1} parent=1 // pred_region
      %2118 = dma.done [#allocation4], 256
    $region65: #{tpu_custom_call.1} parent=1 // pred_fallthru
      _
    %2119 = vsyncpa [#allocation3], 1
    %2120 = vsyncpa [#allocation4], 1

</llo_original>
